<compile_context>
chip_gen: v7x
topology: tpu7x:2x2x1
jax: 0.10.0
libtpu: 0.0.40
codegen_flags: <defaults>
</compile_context>

<pallas_src>
import functools

import jax
import jax.numpy as jnp
from jax import lax
from jax.experimental import pallas as pl
from jax.experimental.pallas import tpu as pltpu


def sanm_attention_kernel(lens_ref, x_ref,
                          wqkv_ref, bqkv_ref, wf_ref, wo_ref, bo_ref,
                          out_ref,
                          qkv_scr, ctx_scr,
                          *, num_heads, d_k, kernel_size, matmul_dtype):
    T = x_ref.shape[1]
    D = x_ref.shape[2]
    b = pl.program_id(0)
    length = lens_ref[b]                                   # valid frames (SMEM scalar)

    x = x_ref[0]                                           # (T, D), f32

    # ---- masks rebuilt in-kernel from the valid length (no HBM mask DMA) ----
    row = lax.broadcasted_iota(jnp.int32, (T, 1), 0)       # query/time index
    mask3 = (row < length).astype(jnp.float32)             # (T, 1) multiplicative
    key_col = lax.broadcasted_iota(jnp.int32, (1, T), 1)   # key index
    addrow = jnp.where(key_col < length,
                       jnp.float32(0.0),
                       jnp.float32(-10000.0))              # (1, T) additive row

    # ---- fused QKV projection (linear_q_k_v); Q scale pre-folded into Wqkv ----
    qkv = jnp.dot(x.astype(matmul_dtype),
                  wqkv_ref[...].astype(matmul_dtype),
                  preferred_element_type=jnp.float32) + bqkv_ref[...]

    # ---- FSMN memory: depthwise conv over time via sublane rolls (XLU) ----
    v = qkv[:, 2 * D:3 * D]                                # f32 v slice
    v_m = v * mask3                                        # inputs * mask
    wf = wf_ref[...]                                       # (K, D) depthwise taps
    left = (kernel_size - 1) // 2
    fsmn = jnp.zeros((T, D), jnp.float32)
    for kk in range(kernel_size):
        s = kk - left                                      # static tap shift
        if s == 0:
            shifted = v_m
        else:
            rolled = pltpu.roll(v_m, shift=int((-s) % T), axis=0)
            valid = jnp.logical_and(row + s >= 0, row + s < T)  # zero wrapped rows
            shifted = jnp.where(valid, rolled, jnp.float32(0.0))
        fsmn = fsmn + shifted * wf[kk:kk + 1, :]
    fsmn_mem = (fsmn + v_m) * mask3                        # (conv + inputs) * mask

    # ---- stage qkv (MXU dtype) so per-head slices are Ref-side loads ----
    qkv_scr[...] = qkv.astype(qkv_scr.dtype)

    # ---- per-head attention; contexts land lane-dense in ctx_scr ----
    for h in range(num_heads):
        s0 = h * d_k                                       # static column offset
        qh = qkv_scr[:, s0:s0 + d_k]
        kh = qkv_scr[:, D + s0:D + s0 + d_k]
        vh = qkv_scr[:, 2 * D + s0:2 * D + s0 + d_k]
        # q @ k^T without materializing a (d_k, T) transpose.
        sc = lax.dot_general(qh, kh, (((1,), (1,)), ((), ())),
                             preferred_element_type=jnp.float32)
        sc = sc + addrow
        sc = sc - jnp.max(sc, axis=-1, keepdims=True)
        p = jnp.exp(sc)
        attn = p * pl.reciprocal(jnp.sum(p, axis=-1, keepdims=True), approx=True)
        ctx = jnp.dot(attn.astype(matmul_dtype), vh,
                      preferred_element_type=jnp.float32)
        ctx_scr[:, s0:s0 + d_k] = ctx.astype(ctx_scr.dtype)

    # ---- single full-depth output projection (linear_out) ----
    att = jnp.dot(ctx_scr[...], wo_ref[...].astype(matmul_dtype),
                  preferred_element_type=jnp.float32)
    out_ref[0] = (att + bo_ref[...] + fsmn_mem).astype(out_ref.dtype)


def fold_q_scale(params, d_k):
    """One-time host transform: fold d_k**-0.5 into the Q part of Wqkv/bqkv."""
    wqkv, bqkv, wf, wo, bo = params
    D = wo.shape[0]
    scale = d_k ** (-0.5)
    wqkv = wqkv.at[:, :D].multiply(scale)
    bqkv = bqkv.at[:, :D].multiply(scale)
    return (wqkv, bqkv, wf, wo, bo)


def sanm_attention(x, lengths, params, *, num_heads, d_k, kernel_size,
                   matmul_dtype=jnp.bfloat16, single_buffer_weights=True):
    """x: (B, T, D) f32; lengths: (B,) int32 valid frame counts.

    `params` must already have the Q scale folded in (see fold_q_scale).
    """
    B, T, D = x.shape
    wqkv, bqkv, wf, wo, bo = params
    kern = functools.partial(sanm_attention_kernel,
                             num_heads=num_heads, d_k=d_k,
                             kernel_size=kernel_size,
                             matmul_dtype=matmul_dtype)

    # ---- generation-aware VMEM budget from actual block/scratch sizes ----
    try:
        vmem_cap = int(pltpu.get_tpu_info().vmem_capacity_bytes)
    except Exception:
        vmem_cap = 128 << 20
    f32 = 4
    mm = jnp.dtype(matmul_dtype).itemsize
    wbuf = 1 if single_buffer_weights else 2
    est = 2 * 2 * T * D * f32                                     # x + out, double-buffered
    est += wbuf * (D * 3 * D + 3 * D + kernel_size * D + D * D + D) * f32   # weights
    est += (3 * T * D + T * D) * mm                               # qkv + ctx scratches
    est += (6 * T * D + 2 * T * T) * f32                          # qkv/fsmn/att/score temporaries
    vmem_limit = int(min(max(est * 3 // 2, 16 << 20), (vmem_cap * 7) // 10))

    def wspec(shape):
        if single_buffer_weights:
            # Constant index_map -> never re-fetched; 1 buffer halves footprint.
            return pl.BlockSpec(shape, lambda b, lens: tuple(0 for _ in shape),
                                pipeline_mode=pl.Buffered(1))
        return pl.BlockSpec(shape, lambda b, lens: tuple(0 for _ in shape))

    grid_spec = pltpu.PrefetchScalarGridSpec(
        num_scalar_prefetch=1,                                    # lengths -> SMEM
        grid=(B,),
        in_specs=[
            pl.BlockSpec((1, T, D), lambda b, lens: (b, 0, 0)),   # x
            wspec((D, 3 * D)),                                    # fused Wqkv (scaled Q)
            wspec((1, 3 * D)),                                    # fused bqkv (scaled Q)
            wspec((kernel_size, D)),                              # fsmn depthwise taps
            wspec((D, D)),                                        # Wo
            wspec((1, D)),                                        # bo
        ],
        out_specs=pl.BlockSpec((1, T, D), lambda b, lens: (b, 0, 0)),
        scratch_shapes=[
            pltpu.VMEM((T, 3 * D), matmul_dtype),                 # staged qkv
            pltpu.VMEM((T, D), matmul_dtype),                     # lane-dense contexts
        ],
    )

    return pl.pallas_call(
        kern,
        out_shape=jax.ShapeDtypeStruct((B, T, D), jnp.float32),
        grid_spec=grid_spec,
        compiler_params=pltpu.CompilerParams(
            dimension_semantics=("parallel",),
            vmem_limit_bytes=vmem_limit),
    )(lengths, x, wqkv, bqkv, wf, wo, bo)


def reference(x, lengths, params, *, num_heads, d_k, kernel_size):
    """Pure-JAX mirror of the PyTorch forward (uses UNfolded params)."""
    wqkv, bqkv, wf, wo, bo = params
    B, T, D = x.shape
    t_idx = jnp.arange(T)
    valid = (t_idx[None, :] < lengths[:, None]).astype(jnp.float32)   # (B, T)
    mask_3d = valid[:, :, None]                                       # (B, T, 1)
    mask_4d = (valid[:, None, :] - 1.0) * 10000.0                     # (B, T, T)

    qkv = x @ wqkv + bqkv
    q, k, v = qkv[..., :D], qkv[..., D:2 * D], qkv[..., 2 * D:]

    left = (kernel_size - 1) // 2
    right = kernel_size - 1 - left
    vm = v * mask_3d
    padded = jnp.pad(vm, ((0, 0), (left, right), (0, 0)))
    fsmn = jnp.zeros_like(vm)
    for kk in range(kernel_size):
        fsmn = fsmn + padded[:, kk:kk + T, :] * wf[kk][None, None, :]
    fsmn = (fsmn + vm) * mask_3d

    def split_heads(t):
        return t.reshape(B, T, num_heads, d_k).transpose(0, 2, 1, 3)

    qh = split_heads(q) * d_k ** (-0.5)
    kh = split_heads(k)
    vh = split_heads(v)
    scores = jnp.einsum('bhqd,bhkd->bhqk', qh, kh) + mask_4d[:, None, :, :]
    attn = jax.nn.softmax(scores, axis=-1)
    ctx = jnp.einsum('bhqk,bhkd->bhqd', attn, vh)
    ctx = ctx.transpose(0, 2, 1, 3).reshape(B, T, D)
    return ctx @ wo + bo + fsmn


if __name__ == "__main__":
    B, T, H, DK, K = 2, 8, 4, 8, 5
    D = H * DK

    key = jax.random.PRNGKey(0)
    ks = jax.random.split(key, 8)
    sc = 0.1
    x = jax.random.normal(ks[0], (B, T, D), jnp.float32)
    wqkv = jax.random.normal(ks[1], (D, 3 * D), jnp.float32) * sc   # fused q|k|v
    bqkv = jax.random.normal(ks[2], (1, 3 * D), jnp.float32) * sc
    wf = jax.random.normal(ks[3], (K, D), jnp.float32) * sc         # depthwise taps
    wo = jax.random.normal(ks[4], (D, D), jnp.float32) * sc
    bo = jax.random.normal(ks[5], (1, D), jnp.float32) * sc
    params = (wqkv, bqkv, wf, wo, bo)

    # Valid-length masks: batch 0 full length, batch 1 has 3 padded frames.
    lengths = jnp.array([T, T - 3], jnp.int32)

    # Kernel consumes params with the Q scale pre-folded (one-time transform).
    folded = fold_q_scale(params, DK)

    # f32 MXU path for a tight correctness check; use matmul_dtype=bf16 in prod.
    out = sanm_attention(x, lengths, folded,
                         num_heads=H, d_k=DK, kernel_size=K,
                         matmul_dtype=jnp.float32)
    out = jax.block_until_ready(out)

    ref = reference(x, lengths, params,
                    num_heads=H, d_k=DK, kernel_size=K)
    assert out.shape == (B, T, D)
    max_err = float(jnp.max(jnp.abs(out - ref)))
    assert jnp.allclose(out, ref, atol=2e-3, rtol=2e-3), max_err
    print("KERNEL_OK")
</pallas_src>

<mosaic_0001>
module attributes {stable_mosaic.version = 11 : i64} {
  func.func @sanm_attention_kernel(%arg0: i32, %arg1: memref<2xi32, #tpu.memory_space<smem>>, %arg2: memref<1x8x32xf32, #tpu.memory_space<vmem>>, %arg3: memref<32x96xf32, #tpu.memory_space<vmem>>, %arg4: memref<1x96xf32, #tpu.memory_space<vmem>>, %arg5: memref<5x32xf32, #tpu.memory_space<vmem>>, %arg6: memref<32x32xf32, #tpu.memory_space<vmem>>, %arg7: memref<1x32xf32, #tpu.memory_space<vmem>>, %arg8: memref<1x8x32xf32, #tpu.memory_space<vmem>>, %arg9: memref<8x96xf32, #tpu.memory_space<vmem>>, %arg10: memref<8x32xf32, #tpu.memory_space<vmem>>) attributes {dimension_semantics = [#tpu.dimension_semantics<parallel>], iteration_bounds = array<i64: 2>, scalar_prefetch = 1 : i64, scratch_operands = 2 : i64, tpu.core_type = #tpu.core_type<tc>, window_params = [{transform_indices = @transform_0, window_bounds = array<i64: 1, 8, 32>}, {pipeline_mode = #tpu.pipeline_mode<synchronous>, transform_indices = @transform_1, window_bounds = array<i64: 32, 96>}, {pipeline_mode = #tpu.pipeline_mode<synchronous>, transform_indices = @transform_2, window_bounds = array<i64: 1, 96>}, {pipeline_mode = #tpu.pipeline_mode<synchronous>, transform_indices = @transform_3, window_bounds = array<i64: 5, 32>}, {pipeline_mode = #tpu.pipeline_mode<synchronous>, transform_indices = @transform_4, window_bounds = array<i64: 32, 32>}, {pipeline_mode = #tpu.pipeline_mode<synchronous>, transform_indices = @transform_5, window_bounds = array<i64: 1, 32>}, {transform_indices = @transform_6, window_bounds = array<i64: 1, 8, 32>}]} {
    %0 = arith.index_cast %arg0 : i32 to index
    %1 = memref.load %arg1[%0] : memref<2xi32, #tpu.memory_space<smem>>
    %c0 = arith.constant 0 : index
    %c0_0 = arith.constant 0 : index
    %c0_1 = arith.constant 0 : index
    %2 = vector.load %arg2[%c0, %c0_0, %c0_1] : memref<1x8x32xf32, #tpu.memory_space<vmem>>, vector<1x8x32xf32>
    %3 = vector.shape_cast %2 : vector<1x8x32xf32> to vector<8x32xf32>
    %4 = tpu.iota {dimensions = array<i32: 0>} : vector<8x1xi32>
    %5 = vector.broadcast %1 : i32 to vector<8x1xi32>
    %6 = arith.cmpi slt, %4, %5 : vector<8x1xi32>
    %7 = arith.extui %6 : vector<8x1xi1> to vector<8x1xi32>
    %8 = arith.sitofp %7 : vector<8x1xi32> to vector<8x1xf32>
    %9 = tpu.iota {dimensions = array<i32: 1>} : vector<1x8xi32>
    %10 = vector.broadcast %1 : i32 to vector<1x8xi32>
    %11 = arith.cmpi slt, %9, %10 : vector<1x8xi32>
    %cst = arith.constant 0.000000e+00 : f32
    %cst_2 = arith.constant -1.000000e+04 : f32
    %12 = vector.broadcast %cst : f32 to vector<1x8xf32>
    %13 = vector.broadcast %cst_2 : f32 to vector<1x8xf32>
    %14 = arith.select %11, %12, %13 : vector<1x8xi1>, vector<1x8xf32>
    %c0_3 = arith.constant 0 : index
    %c0_4 = arith.constant 0 : index
    %15 = vector.load %arg3[%c0_3, %c0_4] : memref<32x96xf32, #tpu.memory_space<vmem>>, vector<32x96xf32>
    %cst_5 = arith.constant dense<0.000000e+00> : vector<8x96xf32>
    %16 = tpu.matmul %3, %15, %cst_5 {dimension_numbers = #tpu.dot_dimension_numbers<[1], [0], [0], [1], [0, 0, 1, 1], [], []>} : vector<8x32xf32>, vector<32x96xf32>, vector<8x96xf32> -> vector<8x96xf32>
    %c0_6 = arith.constant 0 : index
    %c0_7 = arith.constant 0 : index
    %17 = vector.load %arg4[%c0_6, %c0_7] : memref<1x96xf32, #tpu.memory_space<vmem>>, vector<1x96xf32>
    %18 = vector.broadcast %17 : vector<1x96xf32> to vector<8x96xf32>
    %19 = arith.addf %16, %18 : vector<8x96xf32>
    %20 = vector.extract_strided_slice %19 {offsets = [0, 64], sizes = [8, 32], strides = [1, 1]} : vector<8x96xf32> to vector<8x32xf32>
    %21 = vector.broadcast %8 : vector<8x1xf32> to vector<8x32xf32>
    %22 = arith.mulf %20, %21 : vector<8x32xf32>
    %c0_8 = arith.constant 0 : index
    %c0_9 = arith.constant 0 : index
    %23 = vector.load %arg5[%c0_8, %c0_9] : memref<5x32xf32, #tpu.memory_space<vmem>>, vector<5x32xf32>
    %cst_10 = arith.constant 0.000000e+00 : f32
    %24 = vector.broadcast %cst_10 : f32 to vector<8x32xf32>
    %c2_i32 = arith.constant 2 : i32
    %25 = tpu.dynamic_rotate %22 by %c2_i32 dim 0 : vector<8x32xf32>, i32 -> vector<8x32xf32>
    %c-2_i32 = arith.constant -2 : i32
    %26 = vector.broadcast %c-2_i32 : i32 to vector<8x1xi32>
    %27 = arith.addi %4, %26 : vector<8x1xi32>
    %c0_i32 = arith.constant 0 : i32
    %28 = vector.broadcast %c0_i32 : i32 to vector<8x1xi32>
    %29 = arith.cmpi sge, %27, %28 : vector<8x1xi32>
    %c-2_i32_11 = arith.constant -2 : i32
    %30 = vector.broadcast %c-2_i32_11 : i32 to vector<8x1xi32>
    %31 = arith.addi %4, %30 : vector<8x1xi32>
    %c8_i32 = arith.constant 8 : i32
    %32 = vector.broadcast %c8_i32 : i32 to vector<8x1xi32>
    %33 = arith.cmpi slt, %31, %32 : vector<8x1xi32>
    %34 = arith.andi %29, %33 : vector<8x1xi1>
    %cst_12 = arith.constant 0.000000e+00 : f32
    %35 = vector.shape_cast %34 : vector<8x1xi1> to vector<8x1xi1>
    %36 = vector.broadcast %35 : vector<8x1xi1> to vector<8x32xi1>
    %37 = vector.broadcast %cst_12 : f32 to vector<8x32xf32>
    %38 = arith.select %36, %25, %37 : vector<8x32xi1>, vector<8x32xf32>
    %39 = vector.extract_strided_slice %23 {offsets = [0, 0], sizes = [1, 32], strides = [1, 1]} : vector<5x32xf32> to vector<1x32xf32>
    %40 = vector.broadcast %39 : vector<1x32xf32> to vector<8x32xf32>
    %41 = arith.mulf %38, %40 : vector<8x32xf32>
    %42 = arith.addf %24, %41 : vector<8x32xf32>
    %c1_i32 = arith.constant 1 : i32
    %43 = tpu.dynamic_rotate %22 by %c1_i32 dim 0 : vector<8x32xf32>, i32 -> vector<8x32xf32>
    %c-1_i32 = arith.constant -1 : i32
    %44 = vector.broadcast %c-1_i32 : i32 to vector<8x1xi32>
    %45 = arith.addi %4, %44 : vector<8x1xi32>
    %c0_i32_13 = arith.constant 0 : i32
    %46 = vector.broadcast %c0_i32_13 : i32 to vector<8x1xi32>
    %47 = arith.cmpi sge, %45, %46 : vector<8x1xi32>
    %c-1_i32_14 = arith.constant -1 : i32
    %48 = vector.broadcast %c-1_i32_14 : i32 to vector<8x1xi32>
    %49 = arith.addi %4, %48 : vector<8x1xi32>
    %c8_i32_15 = arith.constant 8 : i32
    %50 = vector.broadcast %c8_i32_15 : i32 to vector<8x1xi32>
    %51 = arith.cmpi slt, %49, %50 : vector<8x1xi32>
    %52 = arith.andi %47, %51 : vector<8x1xi1>
    %cst_16 = arith.constant 0.000000e+00 : f32
    %53 = vector.shape_cast %52 : vector<8x1xi1> to vector<8x1xi1>
    %54 = vector.broadcast %53 : vector<8x1xi1> to vector<8x32xi1>
    %55 = vector.broadcast %cst_16 : f32 to vector<8x32xf32>
    %56 = arith.select %54, %43, %55 : vector<8x32xi1>, vector<8x32xf32>
    %57 = vector.extract_strided_slice %23 {offsets = [1, 0], sizes = [1, 32], strides = [1, 1]} : vector<5x32xf32> to vector<1x32xf32>
    %58 = vector.broadcast %57 : vector<1x32xf32> to vector<8x32xf32>
    %59 = arith.mulf %56, %58 : vector<8x32xf32>
    %60 = arith.addf %42, %59 : vector<8x32xf32>
    %61 = vector.extract_strided_slice %23 {offsets = [2, 0], sizes = [1, 32], strides = [1, 1]} : vector<5x32xf32> to vector<1x32xf32>
    %62 = vector.broadcast %61 : vector<1x32xf32> to vector<8x32xf32>
    %63 = arith.mulf %22, %62 : vector<8x32xf32>
    %64 = arith.addf %60, %63 : vector<8x32xf32>
    %c7_i32 = arith.constant 7 : i32
    %65 = tpu.dynamic_rotate %22 by %c7_i32 dim 0 : vector<8x32xf32>, i32 -> vector<8x32xf32>
    %c1_i32_17 = arith.constant 1 : i32
    %66 = vector.broadcast %c1_i32_17 : i32 to vector<8x1xi32>
    %67 = arith.addi %4, %66 : vector<8x1xi32>
    %c0_i32_18 = arith.constant 0 : i32
    %68 = vector.broadcast %c0_i32_18 : i32 to vector<8x1xi32>
    %69 = arith.cmpi sge, %67, %68 : vector<8x1xi32>
    %c1_i32_19 = arith.constant 1 : i32
    %70 = vector.broadcast %c1_i32_19 : i32 to vector<8x1xi32>
    %71 = arith.addi %4, %70 : vector<8x1xi32>
    %c8_i32_20 = arith.constant 8 : i32
    %72 = vector.broadcast %c8_i32_20 : i32 to vector<8x1xi32>
    %73 = arith.cmpi slt, %71, %72 : vector<8x1xi32>
    %74 = arith.andi %69, %73 : vector<8x1xi1>
    %cst_21 = arith.constant 0.000000e+00 : f32
    %75 = vector.shape_cast %74 : vector<8x1xi1> to vector<8x1xi1>
    %76 = vector.broadcast %75 : vector<8x1xi1> to vector<8x32xi1>
    %77 = vector.broadcast %cst_21 : f32 to vector<8x32xf32>
    %78 = arith.select %76, %65, %77 : vector<8x32xi1>, vector<8x32xf32>
    %79 = vector.extract_strided_slice %23 {offsets = [3, 0], sizes = [1, 32], strides = [1, 1]} : vector<5x32xf32> to vector<1x32xf32>
    %80 = vector.broadcast %79 : vector<1x32xf32> to vector<8x32xf32>
    %81 = arith.mulf %78, %80 : vector<8x32xf32>
    %82 = arith.addf %64, %81 : vector<8x32xf32>
    %c6_i32 = arith.constant 6 : i32
    %83 = tpu.dynamic_rotate %22 by %c6_i32 dim 0 : vector<8x32xf32>, i32 -> vector<8x32xf32>
    %c2_i32_22 = arith.constant 2 : i32
    %84 = vector.broadcast %c2_i32_22 : i32 to vector<8x1xi32>
    %85 = arith.addi %4, %84 : vector<8x1xi32>
    %c0_i32_23 = arith.constant 0 : i32
    %86 = vector.broadcast %c0_i32_23 : i32 to vector<8x1xi32>
    %87 = arith.cmpi sge, %85, %86 : vector<8x1xi32>
    %c2_i32_24 = arith.constant 2 : i32
    %88 = vector.broadcast %c2_i32_24 : i32 to vector<8x1xi32>
    %89 = arith.addi %4, %88 : vector<8x1xi32>
    %c8_i32_25 = arith.constant 8 : i32
    %90 = vector.broadcast %c8_i32_25 : i32 to vector<8x1xi32>
    %91 = arith.cmpi slt, %89, %90 : vector<8x1xi32>
    %92 = arith.andi %87, %91 : vector<8x1xi1>
    %cst_26 = arith.constant 0.000000e+00 : f32
    %93 = vector.shape_cast %92 : vector<8x1xi1> to vector<8x1xi1>
    %94 = vector.broadcast %93 : vector<8x1xi1> to vector<8x32xi1>
    %95 = vector.broadcast %cst_26 : f32 to vector<8x32xf32>
    %96 = arith.select %94, %83, %95 : vector<8x32xi1>, vector<8x32xf32>
    %97 = vector.extract_strided_slice %23 {offsets = [4, 0], sizes = [1, 32], strides = [1, 1]} : vector<5x32xf32> to vector<1x32xf32>
    %98 = vector.broadcast %97 : vector<1x32xf32> to vector<8x32xf32>
    %99 = arith.mulf %96, %98 : vector<8x32xf32>
    %100 = arith.addf %82, %99 : vector<8x32xf32>
    %101 = arith.addf %100, %22 : vector<8x32xf32>
    %102 = vector.broadcast %8 : vector<8x1xf32> to vector<8x32xf32>
    %103 = arith.mulf %101, %102 : vector<8x32xf32>
    %c0_27 = arith.constant 0 : index
    %c0_28 = arith.constant 0 : index
    %104 = vector.load %arg9[%c0_27, %c0_28] : memref<8x96xf32, #tpu.memory_space<vmem>>, vector<8x96xf32>
    tpu.vector_store %arg9[%c0_27, %c0_28], %19 {strides = array<i32>} : memref<8x96xf32, #tpu.memory_space<vmem>>, vector<8x96xf32>,
    %c0_29 = arith.constant 0 : index
    %c0_30 = arith.constant 0 : index
    %105 = vector.load %arg9[%c0_29, %c0_30] : memref<8x96xf32, #tpu.memory_space<vmem>>, vector<8x8xf32>
    %c0_31 = arith.constant 0 : index
    %c32 = arith.constant 32 : index
    %106 = vector.load %arg9[%c0_31, %c32] : memref<8x96xf32, #tpu.memory_space<vmem>>, vector<8x8xf32>
    %c0_32 = arith.constant 0 : index
    %c64 = arith.constant 64 : index
    %107 = vector.load %arg9[%c0_32, %c64] : memref<8x96xf32, #tpu.memory_space<vmem>>, vector<8x8xf32>
    %cst_33 = arith.constant dense<0.000000e+00> : vector<8x8xf32>
    %108 = tpu.matmul %105, %106, %cst_33 {dimension_numbers = #tpu.dot_dimension_numbers<[1], [1], [0], [0], [0, 0, 1, 0], [], []>} : vector<8x8xf32>, vector<8x8xf32>, vector<8x8xf32> -> vector<8x8xf32>
    %109 = vector.broadcast %14 : vector<1x8xf32> to vector<8x8xf32>
    %110 = arith.addf %108, %109 : vector<8x8xf32>
    %cst_34 = arith.constant dense<0xFF800000> : vector<8xf32>
    %111 = vector.multi_reduction <maximumf>, %110, %cst_34 [1] : vector<8x8xf32> to vector<8xf32>
    %112 = vector.shape_cast %111 : vector<8xf32> to vector<8x1xf32>
    %113 = vector.broadcast %112 : vector<8x1xf32> to vector<8x8xf32>
    %114 = arith.subf %110, %113 : vector<8x8xf32>
    %115 = math.exp %114 : vector<8x8xf32>
    %cst_35 = arith.constant dense<0.000000e+00> : vector<8xf32>
    %116 = vector.multi_reduction <add>, %115, %cst_35 [1] : vector<8x8xf32> to vector<8xf32>
    %117 = vector.shape_cast %116 : vector<8xf32> to vector<8x1xf32>
    %118 = tpu.reciprocal %117 {approx = true} : vector<8x1xf32> -> vector<8x1xf32>
    %119 = vector.broadcast %118 : vector<8x1xf32> to vector<8x8xf32>
    %120 = arith.mulf %115, %119 : vector<8x8xf32>
    %cst_36 = arith.constant dense<0.000000e+00> : vector<8x8xf32>
    %121 = tpu.matmul %120, %107, %cst_36 {dimension_numbers = #tpu.dot_dimension_numbers<[1], [0], [0], [1], [0, 0, 1, 1], [], []>} : vector<8x8xf32>, vector<8x8xf32>, vector<8x8xf32> -> vector<8x8xf32>
    %c0_37 = arith.constant 0 : index
    %c0_38 = arith.constant 0 : index
    %122 = vector.load %arg10[%c0_37, %c0_38] : memref<8x32xf32, #tpu.memory_space<vmem>>, vector<8x8xf32>
    tpu.vector_store %arg10[%c0_37, %c0_38], %121 {strides = array<i32>} : memref<8x32xf32, #tpu.memory_space<vmem>>, vector<8x8xf32>,
    %c0_39 = arith.constant 0 : index
    %c8 = arith.constant 8 : index
    %123 = vector.load %arg9[%c0_39, %c8] : memref<8x96xf32, #tpu.memory_space<vmem>>, vector<8x8xf32>
    %c0_40 = arith.constant 0 : index
    %c40 = arith.constant 40 : index
    %124 = vector.load %arg9[%c0_40, %c40] : memref<8x96xf32, #tpu.memory_space<vmem>>, vector<8x8xf32>
    %c0_41 = arith.constant 0 : index
    %c72 = arith.constant 72 : index
    %125 = vector.load %arg9[%c0_41, %c72] : memref<8x96xf32, #tpu.memory_space<vmem>>, vector<8x8xf32>
    %cst_42 = arith.constant dense<0.000000e+00> : vector<8x8xf32>
    %126 = tpu.matmul %123, %124, %cst_42 {dimension_numbers = #tpu.dot_dimension_numbers<[1], [1], [0], [0], [0, 0, 1, 0], [], []>} : vector<8x8xf32>, vector<8x8xf32>, vector<8x8xf32> -> vector<8x8xf32>
    %127 = vector.broadcast %14 : vector<1x8xf32> to vector<8x8xf32>
    %128 = arith.addf %126, %127 : vector<8x8xf32>
    %cst_43 = arith.constant dense<0xFF800000> : vector<8xf32>
    %129 = vector.multi_reduction <maximumf>, %128, %cst_43 [1] : vector<8x8xf32> to vector<8xf32>
    %130 = vector.shape_cast %129 : vector<8xf32> to vector<8x1xf32>
    %131 = vector.broadcast %130 : vector<8x1xf32> to vector<8x8xf32>
    %132 = arith.subf %128, %131 : vector<8x8xf32>
    %133 = math.exp %132 : vector<8x8xf32>
    %cst_44 = arith.constant dense<0.000000e+00> : vector<8xf32>
    %134 = vector.multi_reduction <add>, %133, %cst_44 [1] : vector<8x8xf32> to vector<8xf32>
    %135 = vector.shape_cast %134 : vector<8xf32> to vector<8x1xf32>
    %136 = tpu.reciprocal %135 {approx = true} : vector<8x1xf32> -> vector<8x1xf32>
    %137 = vector.broadcast %136 : vector<8x1xf32> to vector<8x8xf32>
    %138 = arith.mulf %133, %137 : vector<8x8xf32>
    %cst_45 = arith.constant dense<0.000000e+00> : vector<8x8xf32>
    %139 = tpu.matmul %138, %125, %cst_45 {dimension_numbers = #tpu.dot_dimension_numbers<[1], [0], [0], [1], [0, 0, 1, 1], [], []>} : vector<8x8xf32>, vector<8x8xf32>, vector<8x8xf32> -> vector<8x8xf32>
    %c0_46 = arith.constant 0 : index
    %c8_47 = arith.constant 8 : index
    %140 = vector.load %arg10[%c0_46, %c8_47] : memref<8x32xf32, #tpu.memory_space<vmem>>, vector<8x8xf32>
    tpu.vector_store %arg10[%c0_46, %c8_47], %139 {strides = array<i32>} : memref<8x32xf32, #tpu.memory_space<vmem>>, vector<8x8xf32>,
    %c0_48 = arith.constant 0 : index
    %c16 = arith.constant 16 : index
    %141 = vector.load %arg9[%c0_48, %c16] : memref<8x96xf32, #tpu.memory_space<vmem>>, vector<8x8xf32>
    %c0_49 = arith.constant 0 : index
    %c48 = arith.constant 48 : index
    %142 = vector.load %arg9[%c0_49, %c48] : memref<8x96xf32, #tpu.memory_space<vmem>>, vector<8x8xf32>
    %c0_50 = arith.constant 0 : index
    %c80 = arith.constant 80 : index
    %143 = vector.load %arg9[%c0_50, %c80] : memref<8x96xf32, #tpu.memory_space<vmem>>, vector<8x8xf32>
    %cst_51 = arith.constant dense<0.000000e+00> : vector<8x8xf32>
    %144 = tpu.matmul %141, %142, %cst_51 {dimension_numbers = #tpu.dot_dimension_numbers<[1], [1], [0], [0], [0, 0, 1, 0], [], []>} : vector<8x8xf32>, vector<8x8xf32>, vector<8x8xf32> -> vector<8x8xf32>
    %145 = vector.broadcast %14 : vector<1x8xf32> to vector<8x8xf32>
    %146 = arith.addf %144, %145 : vector<8x8xf32>
    %cst_52 = arith.constant dense<0xFF800000> : vector<8xf32>
    %147 = vector.multi_reduction <maximumf>, %146, %cst_52 [1] : vector<8x8xf32> to vector<8xf32>
    %148 = vector.shape_cast %147 : vector<8xf32> to vector<8x1xf32>
    %149 = vector.broadcast %148 : vector<8x1xf32> to vector<8x8xf32>
    %150 = arith.subf %146, %149 : vector<8x8xf32>
    %151 = math.exp %150 : vector<8x8xf32>
    %cst_53 = arith.constant dense<0.000000e+00> : vector<8xf32>
    %152 = vector.multi_reduction <add>, %151, %cst_53 [1] : vector<8x8xf32> to vector<8xf32>
    %153 = vector.shape_cast %152 : vector<8xf32> to vector<8x1xf32>
    %154 = tpu.reciprocal %153 {approx = true} : vector<8x1xf32> -> vector<8x1xf32>
    %155 = vector.broadcast %154 : vector<8x1xf32> to vector<8x8xf32>
    %156 = arith.mulf %151, %155 : vector<8x8xf32>
    %cst_54 = arith.constant dense<0.000000e+00> : vector<8x8xf32>
    %157 = tpu.matmul %156, %143, %cst_54 {dimension_numbers = #tpu.dot_dimension_numbers<[1], [0], [0], [1], [0, 0, 1, 1], [], []>} : vector<8x8xf32>, vector<8x8xf32>, vector<8x8xf32> -> vector<8x8xf32>
    %c0_55 = arith.constant 0 : index
    %c16_56 = arith.constant 16 : index
    %158 = vector.load %arg10[%c0_55, %c16_56] : memref<8x32xf32, #tpu.memory_space<vmem>>, vector<8x8xf32>
    tpu.vector_store %arg10[%c0_55, %c16_56], %157 {strides = array<i32>} : memref<8x32xf32, #tpu.memory_space<vmem>>, vector<8x8xf32>,
    %c0_57 = arith.constant 0 : index
    %c24 = arith.constant 24 : index
    %159 = vector.load %arg9[%c0_57, %c24] : memref<8x96xf32, #tpu.memory_space<vmem>>, vector<8x8xf32>
    %c0_58 = arith.constant 0 : index
    %c56 = arith.constant 56 : index
    %160 = vector.load %arg9[%c0_58, %c56] : memref<8x96xf32, #tpu.memory_space<vmem>>, vector<8x8xf32>
    %c0_59 = arith.constant 0 : index
    %c88 = arith.constant 88 : index
    %161 = vector.load %arg9[%c0_59, %c88] : memref<8x96xf32, #tpu.memory_space<vmem>>, vector<8x8xf32>
    %cst_60 = arith.constant dense<0.000000e+00> : vector<8x8xf32>
    %162 = tpu.matmul %159, %160, %cst_60 {dimension_numbers = #tpu.dot_dimension_numbers<[1], [1], [0], [0], [0, 0, 1, 0], [], []>} : vector<8x8xf32>, vector<8x8xf32>, vector<8x8xf32> -> vector<8x8xf32>
    %163 = vector.broadcast %14 : vector<1x8xf32> to vector<8x8xf32>
    %164 = arith.addf %162, %163 : vector<8x8xf32>
    %cst_61 = arith.constant dense<0xFF800000> : vector<8xf32>
    %165 = vector.multi_reduction <maximumf>, %164, %cst_61 [1] : vector<8x8xf32> to vector<8xf32>
    %166 = vector.shape_cast %165 : vector<8xf32> to vector<8x1xf32>
    %167 = vector.broadcast %166 : vector<8x1xf32> to vector<8x8xf32>
    %168 = arith.subf %164, %167 : vector<8x8xf32>
    %169 = math.exp %168 : vector<8x8xf32>
    %cst_62 = arith.constant dense<0.000000e+00> : vector<8xf32>
    %170 = vector.multi_reduction <add>, %169, %cst_62 [1] : vector<8x8xf32> to vector<8xf32>
    %171 = vector.shape_cast %170 : vector<8xf32> to vector<8x1xf32>
    %172 = tpu.reciprocal %171 {approx = true} : vector<8x1xf32> -> vector<8x1xf32>
    %173 = vector.broadcast %172 : vector<8x1xf32> to vector<8x8xf32>
    %174 = arith.mulf %169, %173 : vector<8x8xf32>
    %cst_63 = arith.constant dense<0.000000e+00> : vector<8x8xf32>
    %175 = tpu.matmul %174, %161, %cst_63 {dimension_numbers = #tpu.dot_dimension_numbers<[1], [0], [0], [1], [0, 0, 1, 1], [], []>} : vector<8x8xf32>, vector<8x8xf32>, vector<8x8xf32> -> vector<8x8xf32>
    %c0_64 = arith.constant 0 : index
    %c24_65 = arith.constant 24 : index
    %176 = vector.load %arg10[%c0_64, %c24_65] : memref<8x32xf32, #tpu.memory_space<vmem>>, vector<8x8xf32>
    tpu.vector_store %arg10[%c0_64, %c24_65], %175 {strides = array<i32>} : memref<8x32xf32, #tpu.memory_space<vmem>>, vector<8x8xf32>,
    %c0_66 = arith.constant 0 : index
    %c0_67 = arith.constant 0 : index
    %177 = vector.load %arg10[%c0_66, %c0_67] : memref<8x32xf32, #tpu.memory_space<vmem>>, vector<8x32xf32>
    %c0_68 = arith.constant 0 : index
    %c0_69 = arith.constant 0 : index
    %178 = vector.load %arg6[%c0_68, %c0_69] : memref<32x32xf32, #tpu.memory_space<vmem>>, vector<32x32xf32>
    %cst_70 = arith.constant dense<0.000000e+00> : vector<8x32xf32>
    %179 = tpu.matmul %177, %178, %cst_70 {dimension_numbers = #tpu.dot_dimension_numbers<[1], [0], [0], [1], [0, 0, 1, 1], [], []>} : vector<8x32xf32>, vector<32x32xf32>, vector<8x32xf32> -> vector<8x32xf32>
    %c0_71 = arith.constant 0 : index
    %c0_72 = arith.constant 0 : index
    %180 = vector.load %arg7[%c0_71, %c0_72] : memref<1x32xf32, #tpu.memory_space<vmem>>, vector<1x32xf32>
    %181 = vector.broadcast %180 : vector<1x32xf32> to vector<8x32xf32>
    %182 = arith.addf %179, %181 : vector<8x32xf32>
    %183 = arith.addf %182, %103 : vector<8x32xf32>
    %c0_73 = arith.constant 0 : index
    %c0_74 = arith.constant 0 : index
    %c0_75 = arith.constant 0 : index
    %184 = vector.load %arg8[%c0_73, %c0_74, %c0_75] : memref<1x8x32xf32, #tpu.memory_space<vmem>>, vector<1x8x32xf32>
    %185 = vector.shape_cast %184 : vector<1x8x32xf32> to vector<8x32xf32>
    %186 = vector.shape_cast %183 : vector<8x32xf32> to vector<1x8x32xf32>
    tpu.vector_store %arg8[%c0_73, %c0_74, %c0_75], %186 {strides = array<i32>} : memref<1x8x32xf32, #tpu.memory_space<vmem>>, vector<1x8x32xf32>,
    return
  }
  func.func @transform_0(%arg0: i32, %arg1: memref<2xi32, #tpu.memory_space<smem>>) -> (i32, i32, i32) {
    %c0_i32 = arith.constant 0 : i32
    %c0_i32_0 = arith.constant 0 : i32
    %c0_i32_1 = arith.constant 0 : i32
    return %arg0, %c0_i32, %c0_i32_0 : i32, i32, i32
  }
  func.func @transform_1(%arg0: i32, %arg1: memref<2xi32, #tpu.memory_space<smem>>) -> (i32, i32) {
    %c0_i32 = arith.constant 0 : i32
    %c0_i32_0 = arith.constant 0 : i32
    %c0_i32_1 = arith.constant 0 : i32
    return %c0_i32, %c0_i32_0 : i32, i32
  }
  func.func @transform_2(%arg0: i32, %arg1: memref<2xi32, #tpu.memory_space<smem>>) -> (i32, i32) {
    %c0_i32 = arith.constant 0 : i32
    %c0_i32_0 = arith.constant 0 : i32
    %c0_i32_1 = arith.constant 0 : i32
    return %c0_i32, %c0_i32_0 : i32, i32
  }
  func.func @transform_3(%arg0: i32, %arg1: memref<2xi32, #tpu.memory_space<smem>>) -> (i32, i32) {
    %c0_i32 = arith.constant 0 : i32
    %c0_i32_0 = arith.constant 0 : i32
    %c0_i32_1 = arith.constant 0 : i32
    return %c0_i32, %c0_i32_0 : i32, i32
  }
  func.func @transform_4(%arg0: i32, %arg1: memref<2xi32, #tpu.memory_space<smem>>) -> (i32, i32) {
    %c0_i32 = arith.constant 0 : i32
    %c0_i32_0 = arith.constant 0 : i32
    %c0_i32_1 = arith.constant 0 : i32
    return %c0_i32, %c0_i32_0 : i32, i32
  }
  func.func @transform_5(%arg0: i32, %arg1: memref<2xi32, #tpu.memory_space<smem>>) -> (i32, i32) {
    %c0_i32 = arith.constant 0 : i32
    %c0_i32_0 = arith.constant 0 : i32
    %c0_i32_1 = arith.constant 0 : i32
    return %c0_i32, %c0_i32_0 : i32, i32
  }
  func.func @transform_6(%arg0: i32, %arg1: memref<2xi32, #tpu.memory_space<smem>>) -> (i32, i32, i32) {
    %c0_i32 = arith.constant 0 : i32
    %c0_i32_0 = arith.constant 0 : i32
    %c0_i32_1 = arith.constant 0 : i32
    return %arg0, %c0_i32, %c0_i32_0 : i32, i32, i32
  }
}

</mosaic_0001>

<llo_original>
// kernel: tpu_custom_call.1
$region0: #{tpu_custom_call.1}
  #allocation0 [shape = 'u32[]', space=smem, size = 0x4, offset = 0x4, fixed_abs, tag = 'smem constant byte address 0x4 - core index']
  #allocation1 [shape = 'u32[144,128]{1,0:T(1,128)}', space=vmem, size = 0x12000, scoped, tag = 'internal scratch']
  #allocation2 [shape = 'f32[8,96]{1,0:T(8,128)}', space=vmem, size = 0x1000, scoped, tag = 'scratch operand']
  #allocation3 [shape = 'f32[8,32]{1,0:T(8,128)}', space=vmem, size = 0x1000, scoped, tag = 'scratch operand']
  #allocation4 [shape = 's32[1]{0}', space=sflag, size = 0x4, scoped, tag = 'scoped memory for tpu_custom_call.1']
  #allocation5 [shape = 'u8[512]{0}', space=smem, size = 0x200, scoped, tag = 'prefetched SMEM operand 0']
  %s0 = inlined_call_operand.hbm [shape: s32[2], index: 0, kind: input, shape index: {}]
  %s1 = inlined_call_operand.hbm [shape: f32[2,8,32], index: 1, kind: input, shape index: {}]
  %s2 = inlined_call_operand.hbm [shape: f32[32,96], index: 2, kind: input, shape index: {}]
  %s3 = inlined_call_operand.vmem [shape: f32[1,96], index: 3, kind: input, shape index: {}]
  %s4 = inlined_call_operand.vmem [shape: f32[5,32], index: 4, kind: input, shape index: {}]
  %s5 = inlined_call_operand.hbm [shape: f32[32,32], index: 5, kind: input, shape index: {}]
  %s6 = inlined_call_operand.vmem [shape: f32[1,32], index: 6, kind: input, shape index: {}]
  %s7 = inlined_call_operand.hbm [shape: f32[2,8,32], index: 7, kind: output, shape index: {}]
  %s8 = sld [smem:[#allocation0]]
  $region69: #{tpu_custom_call.1} parent=0
    _
  %s10 = ssub.s32 1, %s8
  %s11 = scalar_select 0, %s10, %s8
  %13 = dma.hbm_to_smem %s0, 16, [#allocation5], [#allocation4]
  %14 = dma.done [#allocation4], 16
  %15 = sfence
  $region1: #{tpu_custom_call.1} parent=0
    #allocation6 [shape = 'u8[8192]{0}', space=vmem, size = 0x2000, scoped, tag = 'input window, operand 1']
    #allocation7 [shape = 's32[2]{0}', space=sflag, size = 0x8, scoped, tag = 'scoped memory for tpu_custom_call.1']
    #allocation8 [shape = 's32[2]{0}', space=sflag, size = 0x8, scoped, tag = 'scoped memory for tpu_custom_call.1']
    #allocation9 [shape = 'u8[16384]{0}', space=vmem, size = 0x4000, scoped, tag = 'input window, operand 2, single buffered']
    #allocation10 [shape = 's32[1]{0}', space=sflag, size = 0x4, scoped, tag = 'scoped memory for tpu_custom_call.1']
    #allocation11 [shape = 'u8[16384]{0}', space=vmem, size = 0x4000, scoped, tag = 'input window, operand 5, single buffered']
    #allocation12 [shape = 'u8[8192]{0}', space=vmem, size = 0x2000, scoped, tag = 'output window, operand 0']
    %16 = vsyncpa [#allocation7], 0
    %s17 = scalar_lea.sflag [#allocation7], 1
    %18 = vsyncpa %s17, 0
    %19 = vsyncpa [#allocation10], 0
    %20 = vsyncpa [#allocation8], 0
    %s21 = scalar_lea.sflag [#allocation8], 1
    %22 = vsyncpa %s21, 0
    loop: start=0, step=1, limit=4
    $region2: #{tpu_custom_call.1} parent=1 // loop_pre_header
      _
    $region3: #{tpu_custom_call.1} parent=1 // loop_header
      %s24 = sphi 0, %s28
      %p25 = scmp.ge.s32.totalorder %s24, 4
      %s34 = sphi 0, %s36
      %s37 = sphi 0, %s34
      %s38 = sphi 0, %s37
      %s54 = sphi 0, %s38
      %s58 = sphi 0, %s58
      %s60 = sphi 0, %s58
      %s61 = sphi 0, %s60
      %s75 = sphi 0, %s61
      %s79 = sphi 0, %s79
      %s81 = sphi 0, %s79
      %s82 = sphi 0, %s81
      %s96 = sphi 0, %s82
      %s100 = sphi 0, %s100
      %s102 = sphi 0, %s100
      %s103 = sphi 0, %s102
      %s117 = sphi 0, %s103
      %s121 = sphi 0, %s121
      %s123 = sphi 0, %s121
      %s124 = sphi 0, %s123
      %s138 = sphi 0, %s124
      %s142 = sphi 0, %s142
      %s144 = sphi 0, %s142
      %s145 = sphi 0, %s144
      %s159 = sphi 0, %s145
      %s165 = sphi 0, %s167
      %s168 = sphi 0, %s165
      %s169 = sphi 0, %s168
      %s185 = sphi 0, %s169
    $region4: #{tpu_custom_call.1} parent=1 // loop_header_branch
      %27 = sbr.rel (%p25) target = $region8
    $region5: #{tpu_custom_call.1} parent=1 // loop_body
      %s29 = ssub.s32 %s24, 1
      %s30 = ssub.s32 %s24, 2
      %s31 = sadd.s32 %s24, 1
      %s32 = ssub.s32 %s24, %s31
      %p33 = scmp.eq.s32.totalorder %s32, 0
      %s35 = sadd.s32 %s34, 1
      %s36 = scalar_select %p33, %s34, %s35
      %p39 = pneg %p33
      %p40 = scmp.eq.s32.totalorder %s24, 1
      %p41 = por %p39, %p40
      %p42 = scmp.ne.s32.totalorder %s34, %s37
      %p43 = scmp.eq.s32.totalorder %s24, 0
      %p44 = por %p42, %p43
      %p45 = scmp.ne.s32.totalorder %s34, %s37
      %p46 = scmp.eq.s32.totalorder %s29, 1
      %p47 = por %p45, %p46
      %p48 = scmp.ne.s32.totalorder %s37, %s38
      %p49 = scmp.eq.s32.totalorder %s29, 0
      %p50 = por %p48, %p49
      %p51 = scmp.ne.s32.totalorder %s37, %s38
      %p52 = scmp.eq.s32.totalorder %s30, 1
      %p53 = por %p51, %p52
      %p55 = scmp.ne.s32.totalorder %s38, %s54
      %p56 = scmp.eq.s32.totalorder %s30, 0
      %p57 = por %p55, %p56
      %s59 = sadd.s32 %s58, 1
      %p62 = scmp.eq.s32.totalorder %s24, 1
      %p63 = scmp.ne.s32.totalorder %s58, %s60
      %p64 = scmp.eq.s32.totalorder %s24, 0
      %p65 = por %p63, %p64
      %p66 = scmp.ne.s32.totalorder %s58, %s60
      %p67 = scmp.eq.s32.totalorder %s29, 1
      %p68 = por %p66, %p67
      %p69 = scmp.ne.s32.totalorder %s60, %s61
      %p70 = scmp.eq.s32.totalorder %s29, 0
      %p71 = por %p69, %p70
      %p72 = scmp.ne.s32.totalorder %s60, %s61
      %p73 = scmp.eq.s32.totalorder %s30, 1
      %p74 = por %p72, %p73
      %p76 = scmp.ne.s32.totalorder %s61, %s75
      %p77 = scmp.eq.s32.totalorder %s30, 0
      %p78 = por %p76, %p77
      %s80 = sadd.s32 %s79, 1
      %p83 = scmp.eq.s32.totalorder %s24, 1
      %p84 = scmp.ne.s32.totalorder %s79, %s81
      %p85 = scmp.eq.s32.totalorder %s24, 0
      %p86 = por %p84, %p85
      %p87 = scmp.ne.s32.totalorder %s79, %s81
      %p88 = scmp.eq.s32.totalorder %s29, 1
      %p89 = por %p87, %p88
      %p90 = scmp.ne.s32.totalorder %s81, %s82
      %p91 = scmp.eq.s32.totalorder %s29, 0
      %p92 = por %p90, %p91
      %p93 = scmp.ne.s32.totalorder %s81, %s82
      %p94 = scmp.eq.s32.totalorder %s30, 1
      %p95 = por %p93, %p94
      %p97 = scmp.ne.s32.totalorder %s82, %s96
      %p98 = scmp.eq.s32.totalorder %s30, 0
      %p99 = por %p97, %p98
      %s101 = sadd.s32 %s100, 1
      %p104 = scmp.eq.s32.totalorder %s24, 1
      %p105 = scmp.ne.s32.totalorder %s100, %s102
      %p106 = scmp.eq.s32.totalorder %s24, 0
      %p107 = por %p105, %p106
      %p108 = scmp.ne.s32.totalorder %s100, %s102
      %p109 = scmp.eq.s32.totalorder %s29, 1
      %p110 = por %p108, %p109
      %p111 = scmp.ne.s32.totalorder %s102, %s103
      %p112 = scmp.eq.s32.totalorder %s29, 0
      %p113 = por %p111, %p112
      %p114 = scmp.ne.s32.totalorder %s102, %s103
      %p115 = scmp.eq.s32.totalorder %s30, 1
      %p116 = por %p114, %p115
      %p118 = scmp.ne.s32.totalorder %s103, %s117
      %p119 = scmp.eq.s32.totalorder %s30, 0
      %p120 = por %p118, %p119
      %s122 = sadd.s32 %s121, 1
      %p125 = scmp.eq.s32.totalorder %s24, 1
      %p126 = scmp.ne.s32.totalorder %s121, %s123
      %p127 = scmp.eq.s32.totalorder %s24, 0
      %p128 = por %p126, %p127
      %p129 = scmp.ne.s32.totalorder %s121, %s123
      %p130 = scmp.eq.s32.totalorder %s29, 1
      %p131 = por %p129, %p130
      %p132 = scmp.ne.s32.totalorder %s123, %s124
      %p133 = scmp.eq.s32.totalorder %s29, 0
      %p134 = por %p132, %p133
      %p135 = scmp.ne.s32.totalorder %s123, %s124
      %p136 = scmp.eq.s32.totalorder %s30, 1
      %p137 = por %p135, %p136
      %p139 = scmp.ne.s32.totalorder %s124, %s138
      %p140 = scmp.eq.s32.totalorder %s30, 0
      %p141 = por %p139, %p140
      %s143 = sadd.s32 %s142, 1
      %p146 = scmp.eq.s32.totalorder %s24, 1
      %p147 = scmp.ne.s32.totalorder %s142, %s144
      %p148 = scmp.eq.s32.totalorder %s24, 0
      %p149 = por %p147, %p148
      %p150 = scmp.ne.s32.totalorder %s142, %s144
      %p151 = scmp.eq.s32.totalorder %s29, 1
      %p152 = por %p150, %p151
      %p153 = scmp.ne.s32.totalorder %s144, %s145
      %p154 = scmp.eq.s32.totalorder %s29, 0
      %p155 = por %p153, %p154
      %p156 = scmp.ne.s32.totalorder %s144, %s145
      %p157 = scmp.eq.s32.totalorder %s30, 1
      %p158 = por %p156, %p157
      %p160 = scmp.ne.s32.totalorder %s145, %s159
      %p161 = scmp.eq.s32.totalorder %s30, 0
      %p162 = por %p160, %p161
      %s163 = ssub.s32 %s24, %s31
      %p164 = scmp.eq.s32.totalorder %s163, 0
      %s166 = sadd.s32 %s165, 1
      %s167 = scalar_select %p164, %s165, %s166
      %p170 = pneg %p164
      %p171 = scmp.eq.s32.totalorder %s24, 1
      %p172 = por %p170, %p171
      %p173 = scmp.ne.s32.totalorder %s165, %s168
      %p174 = scmp.eq.s32.totalorder %s24, 0
      %p175 = por %p173, %p174
      %p176 = scmp.ne.s32.totalorder %s165, %s168
      %p177 = scmp.eq.s32.totalorder %s29, 1
      %p178 = por %p176, %p177
      %p179 = scmp.ne.s32.totalorder %s168, %s169
      %p180 = scmp.eq.s32.totalorder %s29, 0
      %p181 = por %p179, %p180
      %p182 = scmp.ne.s32.totalorder %s168, %s169
      %p183 = scmp.eq.s32.totalorder %s30, 1
      %p184 = por %p182, %p183
      %p186 = scmp.ne.s32.totalorder %s169, %s185
      %p187 = scmp.eq.s32.totalorder %s30, 0
      %p188 = por %p186, %p187
      %p189 = scmp.le.s32.totalorder 1, %s24
      %p190 = scmp.lt.s32.totalorder %s24, 3
      %p191 = pnand %p189, %p190
      %p192 = pneg %p191
      // Predicated region
      $region9: #{tpu_custom_call.1} parent=5 // pred_check
        _
      $region10: #{tpu_custom_call.1} parent=5 // pred_check_branch
        %194 = sbr.rel (%p191) target = $region12
      $region11: #{tpu_custom_call.1} parent=5 // pred_region
        %s195 = ssub.s32 %s24, 1
        // Predicated region
        $region13: #{tpu_custom_call.1} parent=11 // pred_check
          %p196 = pneg %p71
        $region14: #{tpu_custom_call.1} parent=11 // pred_check_branch
          %198 = sbr.rel (%p196) target = $region16
        $region15: #{tpu_custom_call.1} parent=11 // pred_region
          %s200 = ssub.s32 512, 512
          %201 = vsyncadd [#allocation10], %s200
          %s202 = sshll.u32 [#allocation9], 4
          %s203 = int_to_ptr.vmem [resolvable:$true] %s202
          %208 = dma.hbm_to_vmem [thread:$0]  %s2, 512, %s203, [#allocation10], 128, 128, 8
        $region16: #{tpu_custom_call.1} parent=11 // pred_fallthru
          _
        // Predicated region
        $region17: #{tpu_custom_call.1} parent=11 // pred_check
          %p209 = pneg %p92
        $region18: #{tpu_custom_call.1} parent=11 // pred_check_branch
          %211 = sbr.rel (%p209) target = $region20
        $region19: #{tpu_custom_call.1} parent=11 // pred_region
          _
        $region20: #{tpu_custom_call.1} parent=11 // pred_fallthru
          _
        // Predicated region
        $region21: #{tpu_custom_call.1} parent=11 // pred_check
          %p212 = pneg %p113
        $region22: #{tpu_custom_call.1} parent=11 // pred_check_branch
          %214 = sbr.rel (%p212) target = $region24
        $region23: #{tpu_custom_call.1} parent=11 // pred_region
          _
        $region24: #{tpu_custom_call.1} parent=11 // pred_fallthru
          _
        // Predicated region
        $region25: #{tpu_custom_call.1} parent=11 // pred_check
          %p215 = pneg %p134
        $region26: #{tpu_custom_call.1} parent=11 // pred_check_branch
          %217 = sbr.rel (%p215) target = $region28
        $region27: #{tpu_custom_call.1} parent=11 // pred_region
          %s219 = ssub.s32 512, 512
          %220 = vsyncadd [#allocation10], %s219
          %s221 = sshll.u32 [#allocation11], 4
          %s222 = int_to_ptr.vmem [resolvable:$true] %s221
          %227 = dma.hbm_to_vmem [thread:$0]  %s5, 512, %s222, [#allocation10], 128, 128, 8
        $region28: #{tpu_custom_call.1} parent=11 // pred_fallthru
          _
        // Predicated region
        $region29: #{tpu_custom_call.1} parent=11 // pred_check
          %p228 = pneg %p155
        $region30: #{tpu_custom_call.1} parent=11 // pred_check_branch
          %230 = sbr.rel (%p228) target = $region32
        $region31: #{tpu_custom_call.1} parent=11 // pred_region
          _
        $region32: #{tpu_custom_call.1} parent=11 // pred_fallthru
          _
      $region12: #{tpu_custom_call.1} parent=5 // pred_fallthru
        _
      %p231 = scmp.lt.s32.totalorder %s24, 2
      // Predicated region
      $region33: #{tpu_custom_call.1} parent=5 // pred_check
        %p232 = pneg %p231
      $region34: #{tpu_custom_call.1} parent=5 // pred_check_branch
        %234 = sbr.rel (%p232) target = $region36
      $region35: #{tpu_custom_call.1} parent=5 // pred_region
        // Predicated region
        $region37: #{tpu_custom_call.1} parent=35 // pred_check
          %p235 = pneg %p44
        $region38: #{tpu_custom_call.1} parent=35 // pred_check_branch
          %237 = sbr.rel (%p235) target = $region40
        $region39: #{tpu_custom_call.1} parent=35 // pred_region
          %s238 = sand.u32 %s34, 1
          %s239 = scalar_lea.sflag [#allocation7], %s238
          %s240 = sand.u32 %s34, 1
          %s241 = smul.addr %s240, 8
          %s242 = scalar_lea.vmem [#allocation6], %s241
          %s244 = ssub.s32 128, 128
          %245 = vsyncadd %s239, %s244
          %s246 = smul.addr %s24, 128
          %s247 = scalar_lea.hbm %s1, %s246
          %s249 = sshll.u32 %s242, 4
          %s250 = int_to_ptr.vmem [resolvable:$true] %s249
          %252 = dma.hbm_to_vmem [thread:$0]  %s247, 128, %s250, %s239
        $region40: #{tpu_custom_call.1} parent=35 // pred_fallthru
          _
      $region36: #{tpu_custom_call.1} parent=5 // pred_fallthru
        _
      %p253 = scmp.le.s32.totalorder 1, %s24
      %p254 = scmp.lt.s32.totalorder %s24, 3
      %p255 = pnand %p253, %p254
      %p256 = pneg %p255
      // Predicated region
      $region41: #{tpu_custom_call.1} parent=5 // pred_check
        _
      $region42: #{tpu_custom_call.1} parent=5 // pred_check_branch
        %258 = sbr.rel (%p255) target = $region44
      $region43: #{tpu_custom_call.1} parent=5 // pred_region
        %s259 = ssub.s32 %s24, 1
        %s260 = sand.u32 %s37, 1
        %s261 = scalar_lea.sflag [#allocation7], %s260
        %s262 = sand.u32 %s37, 1
        %s263 = smul.addr %s262, 8
        %s264 = scalar_lea.vmem [#allocation6], %s263
        // Predicated region
        $region45: #{tpu_custom_call.1} parent=43 // pred_check
          %p265 = pneg %p50
        $region46: #{tpu_custom_call.1} parent=43 // pred_check_branch
          %267 = sbr.rel (%p265) target = $region48
        $region47: #{tpu_custom_call.1} parent=43 // pred_region
          %268 = dma.done %s261, 128
        $region48: #{tpu_custom_call.1} parent=43 // pred_fallthru
          _
        // Predicated region
        $region49: #{tpu_custom_call.1} parent=43 // pred_check
          %p269 = pneg %p71
        $region50: #{tpu_custom_call.1} parent=43 // pred_check_branch
          %271 = sbr.rel (%p269) target = $region52
        $region51: #{tpu_custom_call.1} parent=43 // pred_region
          %272 = dma.done [#allocation10], 512
        $region52: #{tpu_custom_call.1} parent=43 // pred_fallthru
          _
        // Predicated region
        $region53: #{tpu_custom_call.1} parent=43 // pred_check
          %p273 = pneg %p134
        $region54: #{tpu_custom_call.1} parent=43 // pred_check_branch
          %275 = sbr.rel (%p273) target = $region56
        $region55: #{tpu_custom_call.1} parent=43 // pred_region
          %276 = dma.done [#allocation10], 512
        $region56: #{tpu_custom_call.1} parent=43 // pred_fallthru
          _
        %s277 = sand.u32 %s37, 1
        %s278 = scalar_lea.sflag [#allocation7], %s277
        %s279 = sand.u32 %s37, 1
        %s280 = smul.addr %s279, 8
        %s281 = scalar_lea.vmem [#allocation6], %s280
        %p282 = pneg %p50
        %p283 = pneg %p47
        %p284 = pneg %p71
        %p285 = pneg %p68
        %p286 = pneg %p92
        %p287 = pneg %p89
        %p288 = pneg %p113
        %p289 = pneg %p110
        %p290 = pneg %p134
        %p291 = pneg %p131
        %p292 = pneg %p155
        %p293 = pneg %p152
        %p294 = pneg %p181
        %p295 = pneg %p178
        %s296 = sand.u32 %s168, 1
        %s297 = scalar_lea.sflag [#allocation8], %s296
        %s298 = sand.u32 %s168, 1
        %s299 = smul.addr %s298, 8
        %s300 = scalar_lea.vmem [#allocation12], %s299
        %s301 = sld [smem:[#allocation5 + %s29]]
        %v302 = vld [vmem:[%s264] sm:$0xff]
        %v303 = vlaneseq
        %v304 = vshrl.u32 %v303, 7
        %v305 = vstv %s301
        %vm306 = vcmp.lt.s32.totalorder %v304, %v305
        %v307 = vsel %vm306, 1, 0
        %v308 = vcvt.s32.f32 %v307
        %v309 = vlaneseq
        %v310 = vand.u32 %v309, 127
        %vm311 = vcmp.lt.s32.totalorder %v310, %v305
        %v312 = vsel %vm311, 0.0, -10000.0
        %v313 = vld [vmem:[#allocation9] sm:$0xff]
        %v314 = vld [vmem:[#allocation9 + $0x8] sm:$0xff]
        %v315 = vld [vmem:[#allocation9 + $0x10] sm:$0xff]
        %v316 = vld [vmem:[#allocation9 + $0x18] sm:$0xff]
        %v317 = vld [vmem:[%s3] sm:$0x1]
        %v319 = vlaneseq
        %v320 = vshrl.u32 %v319, 7
        %v321 = vsub.s32 0, %v320
        %v322 = vrot.slane %v317, %v321
        %vm324 = vcmask 261120
        %v326 = vsel %vm324, %v302, 0
        %328 = vmatprep.subr.mxu0 0.0
        %329 = vmatpush1.msra.mxu0 %v313
        %330 = vmatprep.subr.mxu0 0.0
        %331 = vmatpush1.msra.mxu0 %v314
        %332 = vmatprep.subr.mxu0 0.0
        %333 = vmatpush1.msra.mxu0 %v315
        %334 = vmatprep.subr.mxu0 0.0
        %335 = vmatpush1.msra.mxu0 %v316
        %336 = vmatprep.subr.mxu0 0.0
        %337 = vmatpush1.msra.mxu0 0.0
        %338 = vmatprep.subr.mxu0 0.0
        %339 = vmatpush1.msra.mxu0 0.0
        %340 = vmatprep.subr.mxu0 0.0
        %341 = vmatpush1.msra.mxu0 0.0
        %342 = vmatprep.subr.mxu0 0.0
        %343 = vmatpush1.msra.mxu0 0.0
        %344 = vmatprep.subr.mxu0 0.0
        %345 = vmatpush1.msra.mxu0 0.0
        %346 = vmatprep.subr.mxu0 0.0
        %347 = vmatpush1.msra.mxu0 0.0
        %348 = vmatprep.subr.mxu0 0.0
        %349 = vmatpush1.msra.mxu0 0.0
        %350 = vmatprep.subr.mxu0 0.0
        %351 = vmatpush1.msra.mxu0 0.0
        %352 = vmatprep.subr.mxu0 0.0
        %353 = vmatpush1.msra.mxu0 0.0
        %354 = vmatprep.subr.mxu0 0.0
        %355 = vmatpush1.msra.mxu0 0.0
        %356 = vmatprep.subr.mxu0 0.0
        %357 = vmatpush1.msra.mxu0 0.0
        %358 = vmatprep.subr.mxu0 0.0
        %359 = vmatpush1.msra.mxu0 0.0
        %360 = vmatprep.subr.mxu0 0.0
        %361 = vmatpush1.msra.mxu0 0.0
        %362 = vmatprep.subr.mxu0 0.0
        %363 = vmatpush1.msra.mxu0 0.0
        %364 = vmatprep.subr.mxu0 0.0
        %365 = vmatpush1.msra.mxu0 0.0
        %366 = vmatprep.subr.mxu0 0.0
        %367 = vmatpush1.msra.mxu0 0.0
        %368 = vmatprep.subr.mxu0 0.0
        %369 = vmatpush1.msra.mxu0 0.0
        %370 = vmatprep.subr.mxu0 0.0
        %371 = vmatpush1.msra.mxu0 0.0
        %372 = vmatprep.subr.mxu0 0.0
        %373 = vmatpush1.msra.mxu0 0.0
        %374 = vmatprep.subr.mxu0 0.0
        %375 = vmatpush1.msra.mxu0 0.0
        %376 = vmatprep.subr.mxu0 0.0
        %377 = vmatpush1.msra.mxu0 0.0
        %378 = vmatprep.subr.mxu0 0.0
        %379 = vmatpush1.msra.mxu0 0.0
        %380 = vmatprep.subr.mxu0 0.0
        %381 = vmatpush1.msra.mxu0 0.0
        %382 = vmatprep.subr.mxu0 0.0
        %383 = vmatpush1.msra.mxu0 0.0
        %384 = vmatprep.subr.mxu0 0.0
        %385 = vmatpush1.msra.mxu0 0.0
        %386 = vmatprep.subr.mxu0 0.0
        %387 = vmatpush1.msra.mxu0 0.0
        %388 = vmatprep.subr.mxu0 0.0
        %389 = vmatpush1.msra.mxu0 0.0
        %390 = vmatprep.subr.mxu0 0.0
        %391 = vmatpush1.msra.mxu0 0.0
        %392 = vmatprep.mubr.f32.mxu0 0.0
        %393 = vmatmul.mubr.f32.gmra.mrb[0].mxu0 %v326
        %v394 = vpop.f32.mrb[0].mxu0
        %v395 = vadd.f32 %v322, %v394
        %v396 = vpop.f32.mrb[0].mxu0
        %397 = vdwg.mxu0
        %v398 = vmul.f32 %v395, %v308
        %v399 = vld [vmem:[%s4] sm:$0x1f]
        %401 = vrot.lane.b32.xlu0 %v398, 64
        %v402 = vpop.permute.xlu0 %401
        %v404 = vrot.slane %v402, 6
        %v405 = vadd.s32 %v304, 4294967294
        %vm406 = vcmp.ge.s32.totalorder %v405, 0
        %vm407 = vcmp.lt.s32.totalorder %v405, 8
        %vm408 = vmand %vm406, %vm407
        %v409 = vsel %vm408, 1, 0
        %vm410 = vcmp.eq.s32.totalorder %v409, 1
        %v411 = vsel %vm410, %v404, 0.0
        %v412 = vlaneseq
        %v413 = vshrl.u32 %v412, 7
        %v414 = vsub.s32 0, %v413
        %v415 = vrot.slane %v399, %v414
        %v416 = vmul.f32 %v411, %v415
        %v417 = vadd.f32 %v416, 0.0
        %v418 = vrot.slane %v402, 7
        %v419 = vadd.s32 %v304, 4294967295
        %vm420 = vcmp.ge.s32.totalorder %v419, 0
        %vm421 = vcmp.lt.s32.totalorder %v419, 8
        %vm422 = vmand %vm420, %vm421
        %v423 = vsel %vm422, 1, 0
        %vm424 = vcmp.eq.s32.totalorder %v423, 1
        %v425 = vsel %vm424, %v418, 0.0
        %v426 = vlaneseq
        %v427 = vshrl.u32 %v426, 7
        %v428 = vsub.s32 1, %v427
        %v429 = vrot.slane %v399, %v428
        %v430 = vmul.f32 %v425, %v429
        %v431 = vadd.f32 %v417, %v430
        %v432 = vlaneseq
        %v433 = vshrl.u32 %v432, 7
        %v434 = vsub.s32 2, %v433
        %v435 = vrot.slane %v399, %v434
        %437 = vrot.lane.b32.xlu0 %v435, 64
        %v438 = vpop.permute.xlu0 %437
        %v440 = vmul.f32 %v398, %v438
        %442 = vrot.lane.b32.xlu0 %v440, 64
        %v443 = vpop.permute.xlu0 %442
        %v445 = vadd.f32 %v431, %v443
        %v446 = vrot.slane %v402, 1
        %v447 = vadd.s32 %v304, 1
        %vm448 = vcmp.ge.s32.totalorder %v447, 0
        %vm449 = vcmp.lt.s32.totalorder %v447, 8
        %vm450 = vmand %vm448, %vm449
        %v451 = vsel %vm450, 1, 0
        %vm452 = vcmp.eq.s32.totalorder %v451, 1
        %v453 = vsel %vm452, %v446, 0.0
        %v454 = vlaneseq
        %v455 = vshrl.u32 %v454, 7
        %v456 = vsub.s32 3, %v455
        %v457 = vrot.slane %v399, %v456
        %v458 = vmul.f32 %v453, %v457
        %v459 = vadd.f32 %v445, %v458
        %v460 = vrot.slane %v402, 2
        %v461 = vadd.s32 %v304, 2
        %vm462 = vcmp.ge.s32.totalorder %v461, 0
        %vm463 = vcmp.lt.s32.totalorder %v461, 8
        %vm464 = vmand %vm462, %vm463
        %v465 = vsel %vm464, 1, 0
        %vm466 = vcmp.eq.s32.totalorder %v465, 1
        %v467 = vsel %vm466, %v460, 0.0
        %v468 = vlaneseq
        %v469 = vshrl.u32 %v468, 7
        %v470 = vsub.s32 4, %v469
        %v471 = vrot.slane %v399, %v470
        %v472 = vmul.f32 %v467, %v471
        %v473 = vadd.f32 %v459, %v472
        %v474 = vadd.f32 %v473, %v402
        %v475 = vmul.f32 %v474, %v308
        %vm476 = vcmask 785408
        %477 = vst.msk [vmem:[#allocation2] sm:$0xff] %vm476, %v395
        %v478 = vld [vmem:[#allocation2] sm:$0xff]
        %480 = vrot.lane.b32.xlu0 %v478, 96
        %v481 = vpop.permute.xlu0 %480
        %vm482 = vcmask 64512
        %v483 = vsel %vm482, %v478, 0
        %v485 = vsel %vm482, %v481, 0
        %487 = vmatprep.subr.mxu0 0.0
        %488 = vmatpush1.xpose.msra.mxu0 %v485
        %489 = vmatprep.subr.mxu0 0.0
        %490 = vmatpush1.xpose.msra.mxu0 0.0
        %491 = vmatprep.subr.mxu0 0.0
        %492 = vmatpush1.xpose.msra.mxu0 0.0
        %493 = vmatprep.subr.mxu0 0.0
        %494 = vmatpush1.xpose.msra.mxu0 0.0
        %495 = vmatprep.subr.mxu0 0.0
        %496 = vmatpush1.xpose.msra.mxu0 0.0
        %497 = vmatprep.subr.mxu0 0.0
        %498 = vmatpush1.xpose.msra.mxu0 0.0
        %499 = vmatprep.subr.mxu0 0.0
        %500 = vmatpush1.xpose.msra.mxu0 0.0
        %501 = vmatprep.subr.mxu0 0.0
        %502 = vmatpush1.xpose.msra.mxu0 0.0
        %503 = vmatprep.subr.mxu0 0.0
        %504 = vmatpush1.xpose.msra.mxu0 0.0
        %505 = vmatprep.subr.mxu0 0.0
        %506 = vmatpush1.xpose.msra.mxu0 0.0
        %507 = vmatprep.subr.mxu0 0.0
        %508 = vmatpush1.xpose.msra.mxu0 0.0
        %509 = vmatprep.subr.mxu0 0.0
        %510 = vmatpush1.xpose.msra.mxu0 0.0
        %511 = vmatprep.subr.mxu0 0.0
        %512 = vmatpush1.xpose.msra.mxu0 0.0
        %513 = vmatprep.subr.mxu0 0.0
        %514 = vmatpush1.xpose.msra.mxu0 0.0
        %515 = vmatprep.subr.mxu0 0.0
        %516 = vmatpush1.xpose.msra.mxu0 0.0
        %517 = vmatprep.subr.mxu0 0.0
        %518 = vmatpush1.xpose.msra.mxu0 0.0
        %519 = vmatprep.subr.mxu0 0.0
        %520 = vmatpush1.xpose.msra.mxu0 0.0
        %521 = vmatprep.subr.mxu0 0.0
        %522 = vmatpush1.xpose.msra.mxu0 0.0
        %523 = vmatprep.subr.mxu0 0.0
        %524 = vmatpush1.xpose.msra.mxu0 0.0
        %525 = vmatprep.subr.mxu0 0.0
        %526 = vmatpush1.xpose.msra.mxu0 0.0
        %527 = vmatprep.subr.mxu0 0.0
        %528 = vmatpush1.xpose.msra.mxu0 0.0
        %529 = vmatprep.subr.mxu0 0.0
        %530 = vmatpush1.xpose.msra.mxu0 0.0
        %531 = vmatprep.subr.mxu0 0.0
        %532 = vmatpush1.xpose.msra.mxu0 0.0
        %533 = vmatprep.subr.mxu0 0.0
        %534 = vmatpush1.xpose.msra.mxu0 0.0
        %535 = vmatprep.subr.mxu0 0.0
        %536 = vmatpush1.xpose.msra.mxu0 0.0
        %537 = vmatprep.subr.mxu0 0.0
        %538 = vmatpush1.xpose.msra.mxu0 0.0
        %539 = vmatprep.subr.mxu0 0.0
        %540 = vmatpush1.xpose.msra.mxu0 0.0
        %541 = vmatprep.subr.mxu0 0.0
        %542 = vmatpush1.xpose.msra.mxu0 0.0
        %543 = vmatprep.subr.mxu0 0.0
        %544 = vmatpush1.xpose.msra.mxu0 0.0
        %545 = vmatprep.subr.mxu0 0.0
        %546 = vmatpush1.xpose.msra.mxu0 0.0
        %547 = vmatprep.subr.mxu0 0.0
        %548 = vmatpush1.xpose.msra.mxu0 0.0
        %549 = vmatprep.subr.mxu0 0.0
        %550 = vmatpush1.xpose.msra.mxu0 0.0
        %551 = vmatprep.mubr.f32.mxu0 0.0
        %552 = vmatmul.mubr.f32.gmra.mrb[0].mxu0 %v483
        %v553 = vpop.f32.mrb[0].mxu0
        %v554 = vadd.f32 %v312, %v553
        %v555 = vpop.f32.mrb[0].mxu0
        %556 = vdwg.mxu0
        %v557 = vsel %vm482, %v554, -inf
        %558 = vmax.xlane.f32.xlu0 %v557
        %v559 = vpop.xlane.xlu0 %558
        %v560 = vsub.f32 %v554, %v559
        %v561 = vmul.f32 %v560, 1.442695
        %v562 = vpow.pop %v561
        %v563 = vsel %vm482, %v562, 0.0
        %564 = vadd.xlane.f32.xlu0 %v563
        %v565 = vpop.xlane.xlu0 %564
        %v566 = vrcp.pop %v565
        %v567 = vmul.f32 %v562, %v566
        %568 = vrot.lane.b32.xlu0 %v478, 64
        %v569 = vpop.permute.xlu0 %568
        %v572 = vsel %vm482, %v567, 0
        %574 = vmatprep.subr.mxu0 0.0
        %575 = vmatpush1.msra.mxu0 %v569
        %576 = vmatprep.subr.mxu0 0.0
        %577 = vmatpush1.msra.mxu0 0.0
        %578 = vmatprep.subr.mxu0 0.0
        %579 = vmatpush1.msra.mxu0 0.0
        %580 = vmatprep.subr.mxu0 0.0
        %581 = vmatpush1.msra.mxu0 0.0
        %582 = vmatprep.subr.mxu0 0.0
        %583 = vmatpush1.msra.mxu0 0.0
        %584 = vmatprep.subr.mxu0 0.0
        %585 = vmatpush1.msra.mxu0 0.0
        %586 = vmatprep.subr.mxu0 0.0
        %587 = vmatpush1.msra.mxu0 0.0
        %588 = vmatprep.subr.mxu0 0.0
        %589 = vmatpush1.msra.mxu0 0.0
        %590 = vmatprep.subr.mxu0 0.0
        %591 = vmatpush1.msra.mxu0 0.0
        %592 = vmatprep.subr.mxu0 0.0
        %593 = vmatpush1.msra.mxu0 0.0
        %594 = vmatprep.subr.mxu0 0.0
        %595 = vmatpush1.msra.mxu0 0.0
        %596 = vmatprep.subr.mxu0 0.0
        %597 = vmatpush1.msra.mxu0 0.0
        %598 = vmatprep.subr.mxu0 0.0
        %599 = vmatpush1.msra.mxu0 0.0
        %600 = vmatprep.subr.mxu0 0.0
        %601 = vmatpush1.msra.mxu0 0.0
        %602 = vmatprep.subr.mxu0 0.0
        %603 = vmatpush1.msra.mxu0 0.0
        %604 = vmatprep.subr.mxu0 0.0
        %605 = vmatpush1.msra.mxu0 0.0
        %606 = vmatprep.subr.mxu0 0.0
        %607 = vmatpush1.msra.mxu0 0.0
        %608 = vmatprep.subr.mxu0 0.0
        %609 = vmatpush1.msra.mxu0 0.0
        %610 = vmatprep.subr.mxu0 0.0
        %611 = vmatpush1.msra.mxu0 0.0
        %612 = vmatprep.subr.mxu0 0.0
        %613 = vmatpush1.msra.mxu0 0.0
        %614 = vmatprep.subr.mxu0 0.0
        %615 = vmatpush1.msra.mxu0 0.0
        %616 = vmatprep.subr.mxu0 0.0
        %617 = vmatpush1.msra.mxu0 0.0
        %618 = vmatprep.subr.mxu0 0.0
        %619 = vmatpush1.msra.mxu0 0.0
        %620 = vmatprep.subr.mxu0 0.0
        %621 = vmatpush1.msra.mxu0 0.0
        %622 = vmatprep.subr.mxu0 0.0
        %623 = vmatpush1.msra.mxu0 0.0
        %624 = vmatprep.subr.mxu0 0.0
        %625 = vmatpush1.msra.mxu0 0.0
        %626 = vmatprep.subr.mxu0 0.0
        %627 = vmatpush1.msra.mxu0 0.0
        %628 = vmatprep.subr.mxu0 0.0
        %629 = vmatpush1.msra.mxu0 0.0
        %630 = vmatprep.subr.mxu0 0.0
        %631 = vmatpush1.msra.mxu0 0.0
        %632 = vmatprep.subr.mxu0 0.0
        %633 = vmatpush1.msra.mxu0 0.0
        %634 = vmatprep.subr.mxu0 0.0
        %635 = vmatpush1.msra.mxu0 0.0
        %636 = vmatprep.subr.mxu0 0.0
        %637 = vmatpush1.msra.mxu0 0.0
        %638 = vmatprep.mubr.f32.mxu0 0.0
        %639 = vmatmul.mubr.f32.gmra.mrb[0].mxu0 %v572
        %v640 = vpop.f32.mrb[0].mxu0
        %v641 = vadd.f32 0.0, %v640
        %v642 = vpop.f32.mrb[0].mxu0
        %643 = vdwg.mxu0
        %644 = vst.msk [vmem:[#allocation3] sm:$0xff] %vm482, %v641
        %v645 = vld [vmem:[#allocation2] sm:$0xff]
        %647 = vrot.lane.b32.xlu0 %v645, 120
        %v648 = vpop.permute.xlu0 %647
        %649 = vrot.lane.b32.xlu0 %v645, 88
        %v650 = vpop.permute.xlu0 %649
        %v651 = vsel %vm482, %v648, 0
        %v653 = vsel %vm482, %v650, 0
        %655 = vmatprep.subr.mxu0 0.0
        %656 = vmatpush1.xpose.msra.mxu0 %v653
        %657 = vmatprep.subr.mxu0 0.0
        %658 = vmatpush1.xpose.msra.mxu0 0.0
        %659 = vmatprep.subr.mxu0 0.0
        %660 = vmatpush1.xpose.msra.mxu0 0.0
        %661 = vmatprep.subr.mxu0 0.0
        %662 = vmatpush1.xpose.msra.mxu0 0.0
        %663 = vmatprep.subr.mxu0 0.0
        %664 = vmatpush1.xpose.msra.mxu0 0.0
        %665 = vmatprep.subr.mxu0 0.0
        %666 = vmatpush1.xpose.msra.mxu0 0.0
        %667 = vmatprep.subr.mxu0 0.0
        %668 = vmatpush1.xpose.msra.mxu0 0.0
        %669 = vmatprep.subr.mxu0 0.0
        %670 = vmatpush1.xpose.msra.mxu0 0.0
        %671 = vmatprep.subr.mxu0 0.0
        %672 = vmatpush1.xpose.msra.mxu0 0.0
        %673 = vmatprep.subr.mxu0 0.0
        %674 = vmatpush1.xpose.msra.mxu0 0.0
        %675 = vmatprep.subr.mxu0 0.0
        %676 = vmatpush1.xpose.msra.mxu0 0.0
        %677 = vmatprep.subr.mxu0 0.0
        %678 = vmatpush1.xpose.msra.mxu0 0.0
        %679 = vmatprep.subr.mxu0 0.0
        %680 = vmatpush1.xpose.msra.mxu0 0.0
        %681 = vmatprep.subr.mxu0 0.0
        %682 = vmatpush1.xpose.msra.mxu0 0.0
        %683 = vmatprep.subr.mxu0 0.0
        %684 = vmatpush1.xpose.msra.mxu0 0.0
        %685 = vmatprep.subr.mxu0 0.0
        %686 = vmatpush1.xpose.msra.mxu0 0.0
        %687 = vmatprep.subr.mxu0 0.0
        %688 = vmatpush1.xpose.msra.mxu0 0.0
        %689 = vmatprep.subr.mxu0 0.0
        %690 = vmatpush1.xpose.msra.mxu0 0.0
        %691 = vmatprep.subr.mxu0 0.0
        %692 = vmatpush1.xpose.msra.mxu0 0.0
        %693 = vmatprep.subr.mxu0 0.0
        %694 = vmatpush1.xpose.msra.mxu0 0.0
        %695 = vmatprep.subr.mxu0 0.0
        %696 = vmatpush1.xpose.msra.mxu0 0.0
        %697 = vmatprep.subr.mxu0 0.0
        %698 = vmatpush1.xpose.msra.mxu0 0.0
        %699 = vmatprep.subr.mxu0 0.0
        %700 = vmatpush1.xpose.msra.mxu0 0.0
        %701 = vmatprep.subr.mxu0 0.0
        %702 = vmatpush1.xpose.msra.mxu0 0.0
        %703 = vmatprep.subr.mxu0 0.0
        %704 = vmatpush1.xpose.msra.mxu0 0.0
        %705 = vmatprep.subr.mxu0 0.0
        %706 = vmatpush1.xpose.msra.mxu0 0.0
        %707 = vmatprep.subr.mxu0 0.0
        %708 = vmatpush1.xpose.msra.mxu0 0.0
        %709 = vmatprep.subr.mxu0 0.0
        %710 = vmatpush1.xpose.msra.mxu0 0.0
        %711 = vmatprep.subr.mxu0 0.0
        %712 = vmatpush1.xpose.msra.mxu0 0.0
        %713 = vmatprep.subr.mxu0 0.0
        %714 = vmatpush1.xpose.msra.mxu0 0.0
        %715 = vmatprep.subr.mxu0 0.0
        %716 = vmatpush1.xpose.msra.mxu0 0.0
        %717 = vmatprep.subr.mxu0 0.0
        %718 = vmatpush1.xpose.msra.mxu0 0.0
        %719 = vmatprep.mubr.f32.mxu0 0.0
        %720 = vmatmul.mubr.f32.gmra.mrb[0].mxu0 %v651
        %v721 = vpop.f32.mrb[0].mxu0
        %v722 = vadd.f32 %v312, %v721
        %v723 = vpop.f32.mrb[0].mxu0
        %724 = vdwg.mxu0
        %v725 = vsel %vm482, %v722, -inf
        %726 = vmax.xlane.f32.xlu0 %v725
        %v727 = vpop.xlane.xlu0 %726
        %v728 = vsub.f32 %v722, %v727
        %v729 = vmul.f32 %v728, 1.442695
        %v730 = vpow.pop %v729
        %v731 = vsel %vm482, %v730, 0.0
        %732 = vadd.xlane.f32.xlu0 %v731
        %v733 = vpop.xlane.xlu0 %732
        %v734 = vrcp.pop %v733
        %v735 = vmul.f32 %v730, %v734
        %736 = vrot.lane.b32.xlu0 %v645, 56
        %v737 = vpop.permute.xlu0 %736
        %v740 = vsel %vm482, %v735, 0
        %742 = vmatprep.subr.mxu0 0.0
        %743 = vmatpush1.msra.mxu0 %v737
        %744 = vmatprep.subr.mxu0 0.0
        %745 = vmatpush1.msra.mxu0 0.0
        %746 = vmatprep.subr.mxu0 0.0
        %747 = vmatpush1.msra.mxu0 0.0
        %748 = vmatprep.subr.mxu0 0.0
        %749 = vmatpush1.msra.mxu0 0.0
        %750 = vmatprep.subr.mxu0 0.0
        %751 = vmatpush1.msra.mxu0 0.0
        %752 = vmatprep.subr.mxu0 0.0
        %753 = vmatpush1.msra.mxu0 0.0
        %754 = vmatprep.subr.mxu0 0.0
        %755 = vmatpush1.msra.mxu0 0.0
        %756 = vmatprep.subr.mxu0 0.0
        %757 = vmatpush1.msra.mxu0 0.0
        %758 = vmatprep.subr.mxu0 0.0
        %759 = vmatpush1.msra.mxu0 0.0
        %760 = vmatprep.subr.mxu0 0.0
        %761 = vmatpush1.msra.mxu0 0.0
        %762 = vmatprep.subr.mxu0 0.0
        %763 = vmatpush1.msra.mxu0 0.0
        %764 = vmatprep.subr.mxu0 0.0
        %765 = vmatpush1.msra.mxu0 0.0
        %766 = vmatprep.subr.mxu0 0.0
        %767 = vmatpush1.msra.mxu0 0.0
        %768 = vmatprep.subr.mxu0 0.0
        %769 = vmatpush1.msra.mxu0 0.0
        %770 = vmatprep.subr.mxu0 0.0
        %771 = vmatpush1.msra.mxu0 0.0
        %772 = vmatprep.subr.mxu0 0.0
        %773 = vmatpush1.msra.mxu0 0.0
        %774 = vmatprep.subr.mxu0 0.0
        %775 = vmatpush1.msra.mxu0 0.0
        %776 = vmatprep.subr.mxu0 0.0
        %777 = vmatpush1.msra.mxu0 0.0
        %778 = vmatprep.subr.mxu0 0.0
        %779 = vmatpush1.msra.mxu0 0.0
        %780 = vmatprep.subr.mxu0 0.0
        %781 = vmatpush1.msra.mxu0 0.0
        %782 = vmatprep.subr.mxu0 0.0
        %783 = vmatpush1.msra.mxu0 0.0
        %784 = vmatprep.subr.mxu0 0.0
        %785 = vmatpush1.msra.mxu0 0.0
        %786 = vmatprep.subr.mxu0 0.0
        %787 = vmatpush1.msra.mxu0 0.0
        %788 = vmatprep.subr.mxu0 0.0
        %789 = vmatpush1.msra.mxu0 0.0
        %790 = vmatprep.subr.mxu0 0.0
        %791 = vmatpush1.msra.mxu0 0.0
        %792 = vmatprep.subr.mxu0 0.0
        %793 = vmatpush1.msra.mxu0 0.0
        %794 = vmatprep.subr.mxu0 0.0
        %795 = vmatpush1.msra.mxu0 0.0
        %796 = vmatprep.subr.mxu0 0.0
        %797 = vmatpush1.msra.mxu0 0.0
        %798 = vmatprep.subr.mxu0 0.0
        %799 = vmatpush1.msra.mxu0 0.0
        %800 = vmatprep.subr.mxu0 0.0
        %801 = vmatpush1.msra.mxu0 0.0
        %802 = vmatprep.subr.mxu0 0.0
        %803 = vmatpush1.msra.mxu0 0.0
        %804 = vmatprep.subr.mxu0 0.0
        %805 = vmatpush1.msra.mxu0 0.0
        %806 = vmatprep.mubr.f32.mxu0 0.0
        %807 = vmatmul.mubr.f32.gmra.mrb[0].mxu0 %v740
        %v808 = vpop.f32.mrb[0].mxu0
        %v809 = vadd.f32 0.0, %v808
        %v810 = vpop.f32.mrb[0].mxu0
        %811 = vdwg.mxu0
        %813 = vrot.lane.b32.xlu0 %v809, 8
        %v814 = vpop.permute.xlu0 %813
        %vm816 = vcmask 130112
        %817 = vst.msk [vmem:[#allocation3] sm:$0xff] %vm816, %v814
        %v818 = vld [vmem:[#allocation2] sm:$0xff]
        %820 = vrot.lane.b32.xlu0 %v818, 112
        %v821 = vpop.permute.xlu0 %820
        %822 = vrot.lane.b32.xlu0 %v818, 80
        %v823 = vpop.permute.xlu0 %822
        %v824 = vsel %vm482, %v821, 0
        %v826 = vsel %vm482, %v823, 0
        %828 = vmatprep.subr.mxu0 0.0
        %829 = vmatpush1.xpose.msra.mxu0 %v826
        %830 = vmatprep.subr.mxu0 0.0
        %831 = vmatpush1.xpose.msra.mxu0 0.0
        %832 = vmatprep.subr.mxu0 0.0
        %833 = vmatpush1.xpose.msra.mxu0 0.0
        %834 = vmatprep.subr.mxu0 0.0
        %835 = vmatpush1.xpose.msra.mxu0 0.0
        %836 = vmatprep.subr.mxu0 0.0
        %837 = vmatpush1.xpose.msra.mxu0 0.0
        %838 = vmatprep.subr.mxu0 0.0
        %839 = vmatpush1.xpose.msra.mxu0 0.0
        %840 = vmatprep.subr.mxu0 0.0
        %841 = vmatpush1.xpose.msra.mxu0 0.0
        %842 = vmatprep.subr.mxu0 0.0
        %843 = vmatpush1.xpose.msra.mxu0 0.0
        %844 = vmatprep.subr.mxu0 0.0
        %845 = vmatpush1.xpose.msra.mxu0 0.0
        %846 = vmatprep.subr.mxu0 0.0
        %847 = vmatpush1.xpose.msra.mxu0 0.0
        %848 = vmatprep.subr.mxu0 0.0
        %849 = vmatpush1.xpose.msra.mxu0 0.0
        %850 = vmatprep.subr.mxu0 0.0
        %851 = vmatpush1.xpose.msra.mxu0 0.0
        %852 = vmatprep.subr.mxu0 0.0
        %853 = vmatpush1.xpose.msra.mxu0 0.0
        %854 = vmatprep.subr.mxu0 0.0
        %855 = vmatpush1.xpose.msra.mxu0 0.0
        %856 = vmatprep.subr.mxu0 0.0
        %857 = vmatpush1.xpose.msra.mxu0 0.0
        %858 = vmatprep.subr.mxu0 0.0
        %859 = vmatpush1.xpose.msra.mxu0 0.0
        %860 = vmatprep.subr.mxu0 0.0
        %861 = vmatpush1.xpose.msra.mxu0 0.0
        %862 = vmatprep.subr.mxu0 0.0
        %863 = vmatpush1.xpose.msra.mxu0 0.0
        %864 = vmatprep.subr.mxu0 0.0
        %865 = vmatpush1.xpose.msra.mxu0 0.0
        %866 = vmatprep.subr.mxu0 0.0
        %867 = vmatpush1.xpose.msra.mxu0 0.0
        %868 = vmatprep.subr.mxu0 0.0
        %869 = vmatpush1.xpose.msra.mxu0 0.0
        %870 = vmatprep.subr.mxu0 0.0
        %871 = vmatpush1.xpose.msra.mxu0 0.0
        %872 = vmatprep.subr.mxu0 0.0
        %873 = vmatpush1.xpose.msra.mxu0 0.0
        %874 = vmatprep.subr.mxu0 0.0
        %875 = vmatpush1.xpose.msra.mxu0 0.0
        %876 = vmatprep.subr.mxu0 0.0
        %877 = vmatpush1.xpose.msra.mxu0 0.0
        %878 = vmatprep.subr.mxu0 0.0
        %879 = vmatpush1.xpose.msra.mxu0 0.0
        %880 = vmatprep.subr.mxu0 0.0
        %881 = vmatpush1.xpose.msra.mxu0 0.0
        %882 = vmatprep.subr.mxu0 0.0
        %883 = vmatpush1.xpose.msra.mxu0 0.0
        %884 = vmatprep.subr.mxu0 0.0
        %885 = vmatpush1.xpose.msra.mxu0 0.0
        %886 = vmatprep.subr.mxu0 0.0
        %887 = vmatpush1.xpose.msra.mxu0 0.0
        %888 = vmatprep.subr.mxu0 0.0
        %889 = vmatpush1.xpose.msra.mxu0 0.0
        %890 = vmatprep.subr.mxu0 0.0
        %891 = vmatpush1.xpose.msra.mxu0 0.0
        %892 = vmatprep.mubr.f32.mxu0 0.0
        %893 = vmatmul.mubr.f32.gmra.mrb[0].mxu0 %v824
        %v894 = vpop.f32.mrb[0].mxu0
        %v895 = vadd.f32 %v312, %v894
        %v896 = vpop.f32.mrb[0].mxu0
        %897 = vdwg.mxu0
        %v898 = vsel %vm482, %v895, -inf
        %899 = vmax.xlane.f32.xlu0 %v898
        %v900 = vpop.xlane.xlu0 %899
        %v901 = vsub.f32 %v895, %v900
        %v902 = vmul.f32 %v901, 1.442695
        %v903 = vpow.pop %v902
        %v904 = vsel %vm482, %v903, 0.0
        %905 = vadd.xlane.f32.xlu0 %v904
        %v906 = vpop.xlane.xlu0 %905
        %v907 = vrcp.pop %v906
        %v908 = vmul.f32 %v903, %v907
        %909 = vrot.lane.b32.xlu0 %v818, 48
        %v910 = vpop.permute.xlu0 %909
        %v913 = vsel %vm482, %v908, 0
        %915 = vmatprep.subr.mxu0 0.0
        %916 = vmatpush1.msra.mxu0 %v910
        %917 = vmatprep.subr.mxu0 0.0
        %918 = vmatpush1.msra.mxu0 0.0
        %919 = vmatprep.subr.mxu0 0.0
        %920 = vmatpush1.msra.mxu0 0.0
        %921 = vmatprep.subr.mxu0 0.0
        %922 = vmatpush1.msra.mxu0 0.0
        %923 = vmatprep.subr.mxu0 0.0
        %924 = vmatpush1.msra.mxu0 0.0
        %925 = vmatprep.subr.mxu0 0.0
        %926 = vmatpush1.msra.mxu0 0.0
        %927 = vmatprep.subr.mxu0 0.0
        %928 = vmatpush1.msra.mxu0 0.0
        %929 = vmatprep.subr.mxu0 0.0
        %930 = vmatpush1.msra.mxu0 0.0
        %931 = vmatprep.subr.mxu0 0.0
        %932 = vmatpush1.msra.mxu0 0.0
        %933 = vmatprep.subr.mxu0 0.0
        %934 = vmatpush1.msra.mxu0 0.0
        %935 = vmatprep.subr.mxu0 0.0
        %936 = vmatpush1.msra.mxu0 0.0
        %937 = vmatprep.subr.mxu0 0.0
        %938 = vmatpush1.msra.mxu0 0.0
        %939 = vmatprep.subr.mxu0 0.0
        %940 = vmatpush1.msra.mxu0 0.0
        %941 = vmatprep.subr.mxu0 0.0
        %942 = vmatpush1.msra.mxu0 0.0
        %943 = vmatprep.subr.mxu0 0.0
        %944 = vmatpush1.msra.mxu0 0.0
        %945 = vmatprep.subr.mxu0 0.0
        %946 = vmatpush1.msra.mxu0 0.0
        %947 = vmatprep.subr.mxu0 0.0
        %948 = vmatpush1.msra.mxu0 0.0
        %949 = vmatprep.subr.mxu0 0.0
        %950 = vmatpush1.msra.mxu0 0.0
        %951 = vmatprep.subr.mxu0 0.0
        %952 = vmatpush1.msra.mxu0 0.0
        %953 = vmatprep.subr.mxu0 0.0
        %954 = vmatpush1.msra.mxu0 0.0
        %955 = vmatprep.subr.mxu0 0.0
        %956 = vmatpush1.msra.mxu0 0.0
        %957 = vmatprep.subr.mxu0 0.0
        %958 = vmatpush1.msra.mxu0 0.0
        %959 = vmatprep.subr.mxu0 0.0
        %960 = vmatpush1.msra.mxu0 0.0
        %961 = vmatprep.subr.mxu0 0.0
        %962 = vmatpush1.msra.mxu0 0.0
        %963 = vmatprep.subr.mxu0 0.0
        %964 = vmatpush1.msra.mxu0 0.0
        %965 = vmatprep.subr.mxu0 0.0
        %966 = vmatpush1.msra.mxu0 0.0
        %967 = vmatprep.subr.mxu0 0.0
        %968 = vmatpush1.msra.mxu0 0.0
        %969 = vmatprep.subr.mxu0 0.0
        %970 = vmatpush1.msra.mxu0 0.0
        %971 = vmatprep.subr.mxu0 0.0
        %972 = vmatpush1.msra.mxu0 0.0
        %973 = vmatprep.subr.mxu0 0.0
        %974 = vmatpush1.msra.mxu0 0.0
        %975 = vmatprep.subr.mxu0 0.0
        %976 = vmatpush1.msra.mxu0 0.0
        %977 = vmatprep.subr.mxu0 0.0
        %978 = vmatpush1.msra.mxu0 0.0
        %979 = vmatprep.mubr.f32.mxu0 0.0
        %980 = vmatmul.mubr.f32.gmra.mrb[0].mxu0 %v913
        %v981 = vpop.f32.mrb[0].mxu0
        %v982 = vadd.f32 0.0, %v981
        %v983 = vpop.f32.mrb[0].mxu0
        %984 = vdwg.mxu0
        %986 = vrot.lane.b32.xlu0 %v982, 16
        %v987 = vpop.permute.xlu0 %986
        %vm989 = vcmask 195712
        %990 = vst.msk [vmem:[#allocation3] sm:$0xff] %vm989, %v987
        %v991 = vld [vmem:[#allocation2] sm:$0xff]
        %993 = vrot.lane.b32.xlu0 %v991, 104
        %v994 = vpop.permute.xlu0 %993
        %995 = vrot.lane.b32.xlu0 %v991, 72
        %v996 = vpop.permute.xlu0 %995
        %v997 = vsel %vm482, %v994, 0
        %v999 = vsel %vm482, %v996, 0
        %1001 = vmatprep.subr.mxu0 0.0
        %1002 = vmatpush1.xpose.msra.mxu0 %v999
        %1003 = vmatprep.subr.mxu0 0.0
        %1004 = vmatpush1.xpose.msra.mxu0 0.0
        %1005 = vmatprep.subr.mxu0 0.0
        %1006 = vmatpush1.xpose.msra.mxu0 0.0
        %1007 = vmatprep.subr.mxu0 0.0
        %1008 = vmatpush1.xpose.msra.mxu0 0.0
        %1009 = vmatprep.subr.mxu0 0.0
        %1010 = vmatpush1.xpose.msra.mxu0 0.0
        %1011 = vmatprep.subr.mxu0 0.0
        %1012 = vmatpush1.xpose.msra.mxu0 0.0
        %1013 = vmatprep.subr.mxu0 0.0
        %1014 = vmatpush1.xpose.msra.mxu0 0.0
        %1015 = vmatprep.subr.mxu0 0.0
        %1016 = vmatpush1.xpose.msra.mxu0 0.0
        %1017 = vmatprep.subr.mxu0 0.0
        %1018 = vmatpush1.xpose.msra.mxu0 0.0
        %1019 = vmatprep.subr.mxu0 0.0
        %1020 = vmatpush1.xpose.msra.mxu0 0.0
        %1021 = vmatprep.subr.mxu0 0.0
        %1022 = vmatpush1.xpose.msra.mxu0 0.0
        %1023 = vmatprep.subr.mxu0 0.0
        %1024 = vmatpush1.xpose.msra.mxu0 0.0
        %1025 = vmatprep.subr.mxu0 0.0
        %1026 = vmatpush1.xpose.msra.mxu0 0.0
        %1027 = vmatprep.subr.mxu0 0.0
        %1028 = vmatpush1.xpose.msra.mxu0 0.0
        %1029 = vmatprep.subr.mxu0 0.0
        %1030 = vmatpush1.xpose.msra.mxu0 0.0
        %1031 = vmatprep.subr.mxu0 0.0
        %1032 = vmatpush1.xpose.msra.mxu0 0.0
        %1033 = vmatprep.subr.mxu0 0.0
        %1034 = vmatpush1.xpose.msra.mxu0 0.0
        %1035 = vmatprep.subr.mxu0 0.0
        %1036 = vmatpush1.xpose.msra.mxu0 0.0
        %1037 = vmatprep.subr.mxu0 0.0
        %1038 = vmatpush1.xpose.msra.mxu0 0.0
        %1039 = vmatprep.subr.mxu0 0.0
        %1040 = vmatpush1.xpose.msra.mxu0 0.0
        %1041 = vmatprep.subr.mxu0 0.0
        %1042 = vmatpush1.xpose.msra.mxu0 0.0
        %1043 = vmatprep.subr.mxu0 0.0
        %1044 = vmatpush1.xpose.msra.mxu0 0.0
        %1045 = vmatprep.subr.mxu0 0.0
        %1046 = vmatpush1.xpose.msra.mxu0 0.0
        %1047 = vmatprep.subr.mxu0 0.0
        %1048 = vmatpush1.xpose.msra.mxu0 0.0
        %1049 = vmatprep.subr.mxu0 0.0
        %1050 = vmatpush1.xpose.msra.mxu0 0.0
        %1051 = vmatprep.subr.mxu0 0.0
        %1052 = vmatpush1.xpose.msra.mxu0 0.0
        %1053 = vmatprep.subr.mxu0 0.0
        %1054 = vmatpush1.xpose.msra.mxu0 0.0
        %1055 = vmatprep.subr.mxu0 0.0
        %1056 = vmatpush1.xpose.msra.mxu0 0.0
        %1057 = vmatprep.subr.mxu0 0.0
        %1058 = vmatpush1.xpose.msra.mxu0 0.0
        %1059 = vmatprep.subr.mxu0 0.0
        %1060 = vmatpush1.xpose.msra.mxu0 0.0
        %1061 = vmatprep.subr.mxu0 0.0
        %1062 = vmatpush1.xpose.msra.mxu0 0.0
        %1063 = vmatprep.subr.mxu0 0.0
        %1064 = vmatpush1.xpose.msra.mxu0 0.0
        %1065 = vmatprep.mubr.f32.mxu0 0.0
        %1066 = vmatmul.mubr.f32.gmra.mrb[0].mxu0 %v997
        %v1067 = vpop.f32.mrb[0].mxu0
        %v1068 = vadd.f32 %v312, %v1067
        %v1069 = vpop.f32.mrb[0].mxu0
        %1070 = vdwg.mxu0
        %v1071 = vsel %vm482, %v1068, -inf
        %1072 = vmax.xlane.f32.xlu0 %v1071
        %v1073 = vpop.xlane.xlu0 %1072
        %v1074 = vsub.f32 %v1068, %v1073
        %v1075 = vmul.f32 %v1074, 1.442695
        %v1076 = vpow.pop %v1075
        %v1077 = vsel %vm482, %v1076, 0.0
        %1078 = vadd.xlane.f32.xlu0 %v1077
        %v1079 = vpop.xlane.xlu0 %1078
        %v1080 = vrcp.pop %v1079
        %v1081 = vmul.f32 %v1076, %v1080
        %1082 = vrot.lane.b32.xlu0 %v991, 40
        %v1083 = vpop.permute.xlu0 %1082
        %v1086 = vsel %vm482, %v1081, 0
        %1088 = vmatprep.subr.mxu0 0.0
        %1089 = vmatpush1.msra.mxu0 %v1083
        %1090 = vmatprep.subr.mxu0 0.0
        %1091 = vmatpush1.msra.mxu0 0.0
        %1092 = vmatprep.subr.mxu0 0.0
        %1093 = vmatpush1.msra.mxu0 0.0
        %1094 = vmatprep.subr.mxu0 0.0
        %1095 = vmatpush1.msra.mxu0 0.0
        %1096 = vmatprep.subr.mxu0 0.0
        %1097 = vmatpush1.msra.mxu0 0.0
        %1098 = vmatprep.subr.mxu0 0.0
        %1099 = vmatpush1.msra.mxu0 0.0
        %1100 = vmatprep.subr.mxu0 0.0
        %1101 = vmatpush1.msra.mxu0 0.0
        %1102 = vmatprep.subr.mxu0 0.0
        %1103 = vmatpush1.msra.mxu0 0.0
        %1104 = vmatprep.subr.mxu0 0.0
        %1105 = vmatpush1.msra.mxu0 0.0
        %1106 = vmatprep.subr.mxu0 0.0
        %1107 = vmatpush1.msra.mxu0 0.0
        %1108 = vmatprep.subr.mxu0 0.0
        %1109 = vmatpush1.msra.mxu0 0.0
        %1110 = vmatprep.subr.mxu0 0.0
        %1111 = vmatpush1.msra.mxu0 0.0
        %1112 = vmatprep.subr.mxu0 0.0
        %1113 = vmatpush1.msra.mxu0 0.0
        %1114 = vmatprep.subr.mxu0 0.0
        %1115 = vmatpush1.msra.mxu0 0.0
        %1116 = vmatprep.subr.mxu0 0.0
        %1117 = vmatpush1.msra.mxu0 0.0
        %1118 = vmatprep.subr.mxu0 0.0
        %1119 = vmatpush1.msra.mxu0 0.0
        %1120 = vmatprep.subr.mxu0 0.0
        %1121 = vmatpush1.msra.mxu0 0.0
        %1122 = vmatprep.subr.mxu0 0.0
        %1123 = vmatpush1.msra.mxu0 0.0
        %1124 = vmatprep.subr.mxu0 0.0
        %1125 = vmatpush1.msra.mxu0 0.0
        %1126 = vmatprep.subr.mxu0 0.0
        %1127 = vmatpush1.msra.mxu0 0.0
        %1128 = vmatprep.subr.mxu0 0.0
        %1129 = vmatpush1.msra.mxu0 0.0
        %1130 = vmatprep.subr.mxu0 0.0
        %1131 = vmatpush1.msra.mxu0 0.0
        %1132 = vmatprep.subr.mxu0 0.0
        %1133 = vmatpush1.msra.mxu0 0.0
        %1134 = vmatprep.subr.mxu0 0.0
        %1135 = vmatpush1.msra.mxu0 0.0
        %1136 = vmatprep.subr.mxu0 0.0
        %1137 = vmatpush1.msra.mxu0 0.0
        %1138 = vmatprep.subr.mxu0 0.0
        %1139 = vmatpush1.msra.mxu0 0.0
        %1140 = vmatprep.subr.mxu0 0.0
        %1141 = vmatpush1.msra.mxu0 0.0
        %1142 = vmatprep.subr.mxu0 0.0
        %1143 = vmatpush1.msra.mxu0 0.0
        %1144 = vmatprep.subr.mxu0 0.0
        %1145 = vmatpush1.msra.mxu0 0.0
        %1146 = vmatprep.subr.mxu0 0.0
        %1147 = vmatpush1.msra.mxu0 0.0
        %1148 = vmatprep.subr.mxu0 0.0
        %1149 = vmatpush1.msra.mxu0 0.0
        %1150 = vmatprep.subr.mxu0 0.0
        %1151 = vmatpush1.msra.mxu0 0.0
        %1152 = vmatprep.mubr.f32.mxu0 0.0
        %1153 = vmatmul.mubr.f32.gmra.mrb[0].mxu0 %v1086
        %v1154 = vpop.f32.mrb[0].mxu0
        %v1155 = vadd.f32 0.0, %v1154
        %v1156 = vpop.f32.mrb[0].mxu0
        %1157 = vdwg.mxu0
        %1159 = vrot.lane.b32.xlu0 %v1155, 24
        %v1160 = vpop.permute.xlu0 %1159
        %vm1162 = vcmask 261312
        %1163 = vst.msk [vmem:[#allocation3] sm:$0xff] %vm1162, %v1160
        %v1164 = vld [vmem:[#allocation3] sm:$0xff]
        %v1165 = vld [vmem:[#allocation11] sm:$0xff]
        %v1166 = vld [vmem:[#allocation11 + $0x8] sm:$0xff]
        %v1167 = vld [vmem:[#allocation11 + $0x10] sm:$0xff]
        %v1168 = vld [vmem:[#allocation11 + $0x18] sm:$0xff]
        %v1169 = vld [vmem:[%s6] sm:$0x1]
        %v1171 = vlaneseq
        %v1172 = vshrl.u32 %v1171, 7
        %v1173 = vsub.s32 0, %v1172
        %v1174 = vrot.slane %v1169, %v1173
        %v1177 = vsel %vm324, %v1164, 0
        %1179 = vmatprep.subr.mxu0 0.0
        %1180 = vmatpush1.msra.mxu0 %v1165
        %1181 = vmatprep.subr.mxu0 0.0
        %1182 = vmatpush1.msra.mxu0 %v1166
        %1183 = vmatprep.subr.mxu0 0.0
        %1184 = vmatpush1.msra.mxu0 %v1167
        %1185 = vmatprep.subr.mxu0 0.0
        %1186 = vmatpush1.msra.mxu0 %v1168
        %1187 = vmatprep.subr.mxu0 0.0
        %1188 = vmatpush1.msra.mxu0 0.0
        %1189 = vmatprep.subr.mxu0 0.0
        %1190 = vmatpush1.msra.mxu0 0.0
        %1191 = vmatprep.subr.mxu0 0.0
        %1192 = vmatpush1.msra.mxu0 0.0
        %1193 = vmatprep.subr.mxu0 0.0
        %1194 = vmatpush1.msra.mxu0 0.0
        %1195 = vmatprep.subr.mxu0 0.0
        %1196 = vmatpush1.msra.mxu0 0.0
        %1197 = vmatprep.subr.mxu0 0.0
        %1198 = vmatpush1.msra.mxu0 0.0
        %1199 = vmatprep.subr.mxu0 0.0
        %1200 = vmatpush1.msra.mxu0 0.0
        %1201 = vmatprep.subr.mxu0 0.0
        %1202 = vmatpush1.msra.mxu0 0.0
        %1203 = vmatprep.subr.mxu0 0.0
        %1204 = vmatpush1.msra.mxu0 0.0
        %1205 = vmatprep.subr.mxu0 0.0
        %1206 = vmatpush1.msra.mxu0 0.0
        %1207 = vmatprep.subr.mxu0 0.0
        %1208 = vmatpush1.msra.mxu0 0.0
        %1209 = vmatprep.subr.mxu0 0.0
        %1210 = vmatpush1.msra.mxu0 0.0
        %1211 = vmatprep.subr.mxu0 0.0
        %1212 = vmatpush1.msra.mxu0 0.0
        %1213 = vmatprep.subr.mxu0 0.0
        %1214 = vmatpush1.msra.mxu0 0.0
        %1215 = vmatprep.subr.mxu0 0.0
        %1216 = vmatpush1.msra.mxu0 0.0
        %1217 = vmatprep.subr.mxu0 0.0
        %1218 = vmatpush1.msra.mxu0 0.0
        %1219 = vmatprep.subr.mxu0 0.0
        %1220 = vmatpush1.msra.mxu0 0.0
        %1221 = vmatprep.subr.mxu0 0.0
        %1222 = vmatpush1.msra.mxu0 0.0
        %1223 = vmatprep.subr.mxu0 0.0
        %1224 = vmatpush1.msra.mxu0 0.0
        %1225 = vmatprep.subr.mxu0 0.0
        %1226 = vmatpush1.msra.mxu0 0.0
        %1227 = vmatprep.subr.mxu0 0.0
        %1228 = vmatpush1.msra.mxu0 0.0
        %1229 = vmatprep.subr.mxu0 0.0
        %1230 = vmatpush1.msra.mxu0 0.0
        %1231 = vmatprep.subr.mxu0 0.0
        %1232 = vmatpush1.msra.mxu0 0.0
        %1233 = vmatprep.subr.mxu0 0.0
        %1234 = vmatpush1.msra.mxu0 0.0
        %1235 = vmatprep.subr.mxu0 0.0
        %1236 = vmatpush1.msra.mxu0 0.0
        %1237 = vmatprep.subr.mxu0 0.0
        %1238 = vmatpush1.msra.mxu0 0.0
        %1239 = vmatprep.subr.mxu0 0.0
        %1240 = vmatpush1.msra.mxu0 0.0
        %1241 = vmatprep.subr.mxu0 0.0
        %1242 = vmatpush1.msra.mxu0 0.0
        %1243 = vmatprep.mubr.f32.mxu0 0.0
        %1244 = vmatmul.mubr.f32.gmra.mrb[0].mxu0 %v1177
        %v1245 = vpop.f32.mrb[0].mxu0
        %v1246 = vadd.f32 %v1174, %v1245
        %v1247 = vpop.f32.mrb[0].mxu0
        %1248 = vdwg.mxu0
        %v1249 = vadd.f32 %v1246, %v475
        %1250 = vst.msk [vmem:[%s300] sm:$0xff] %vm324, %v1249
        %s1251 = sand.u32 %s168, 1
        %s1252 = scalar_lea.sflag [#allocation8], %s1251
        %s1253 = sand.u32 %s168, 1
        %s1254 = smul.addr %s1253, 8
        %s1255 = scalar_lea.vmem [#allocation12], %s1254
        // Predicated region
        $region57: #{tpu_custom_call.1} parent=43 // pred_check
          %p1256 = pneg %p178
        $region58: #{tpu_custom_call.1} parent=43 // pred_check_branch
          %1258 = sbr.rel (%p1256) target = $region60
        $region59: #{tpu_custom_call.1} parent=43 // pred_region
          %s1260 = ssub.s32 128, 128
          %1261 = vsyncadd %s1252, %s1260
          %s1262 = smul.addr %s29, 128
          %s1263 = scalar_lea.hbm %s7, %s1262
          %s1265 = sshll.u32 %s1255, 4
          %s1266 = int_to_ptr.vmem [resolvable:$true] %s1265
          %1268 = dma.vmem_to_hbm [thread:$0]  %s1266, 128, %s1263, %s1252
        $region60: #{tpu_custom_call.1} parent=43 // pred_fallthru
          _
      $region44: #{tpu_custom_call.1} parent=5 // pred_fallthru
        _
      %p1269 = scmp.le.s32.totalorder 2, %s24
      // Predicated region
      $region61: #{tpu_custom_call.1} parent=5 // pred_check
        %p1270 = pneg %p1269
      $region62: #{tpu_custom_call.1} parent=5 // pred_check_branch
        %1272 = sbr.rel (%p1270) target = $region64
      $region63: #{tpu_custom_call.1} parent=5 // pred_region
        %s1273 = ssub.s32 %s24, 2
        // Predicated region
        $region65: #{tpu_custom_call.1} parent=63 // pred_check
          %p1274 = pneg %p184
        $region66: #{tpu_custom_call.1} parent=63 // pred_check_branch
          %1276 = sbr.rel (%p1274) target = $region68
        $region67: #{tpu_custom_call.1} parent=63 // pred_region
          %s1277 = sand.u32 %s169, 1
          %s1278 = scalar_lea.sflag [#allocation8], %s1277
          %s1279 = sand.u32 %s169, 1
          %s1280 = smul.addr %s1279, 8
          %s1281 = scalar_lea.vmem [#allocation12], %s1280
          %1282 = dma.done %s1278, 128
        $region68: #{tpu_custom_call.1} parent=63 // pred_fallthru
          _
      $region64: #{tpu_custom_call.1} parent=5 // pred_fallthru
        _
    $region6: #{tpu_custom_call.1} parent=1 // loop_footer
      %s28 = sadd.s32 1, %s24
    $region7: #{tpu_custom_call.1} parent=1 // loop_footer_branch
      %23 = sbr.rel target = $region3
    $region8: #{tpu_custom_call.1} parent=1 // loop_exit
      _
    %1283 = vsyncpa [#allocation7], 1
    %s1284 = scalar_lea.sflag [#allocation7], 1
    %1285 = vsyncpa %s1284, 1
    %1286 = vsyncpa [#allocation10], 1
    %1287 = vsyncpa [#allocation8], 1
    %s1288 = scalar_lea.sflag [#allocation8], 1
    %1289 = vsyncpa %s1288, 1

</llo_original>
